<compile_context>
chip_gen: v6e
topology: v6e:2x2x1
jax: 0.10.0
libtpu: 0.0.40
codegen_flags: <defaults>
</compile_context>

<pallas_src>
import functools

import jax
import jax.numpy as jnp
from jax import lax
from jax.experimental import pallas as pl
from jax.experimental.pallas import tpu as pltpu

_NEG_INF = float("-inf")


def _invnet_kernel(x_ref, em_ref, tgt_ref, out_ref,
                   m_ref, l_ref, tl_ref, topk_ref,
                   *, knn, use_smooth, num_classes, c_blk, mask_needed):
    c = pl.program_id(1)
    n_c = pl.num_programs(1)

    # ---- init per-row accumulators at the start of each C sweep ----
    @pl.when(c == 0)
    def _():
        m_ref[...] = jnp.full_like(m_ref, _NEG_INF)
        l_ref[...] = jnp.zeros_like(l_ref)
        tl_ref[...] = jnp.zeros_like(tl_ref)
        if use_smooth:
            topk_ref[...] = jnp.full_like(topk_ref, _NEG_INF)

    # ---- MXU: (b_blk, F) x (c_blk, F)^T, bf16 operands, f32 accumulate ----
    logits = lax.dot_general(
        x_ref[...], em_ref[...], (((1,), (1,)), ((), ())),
        preferred_element_type=jnp.float32)                  # (b_blk, c_blk) f32

    b_blk = logits.shape[0]
    # Single full-tile iota, reused for padding mask / target select / top-k.
    lcol = lax.broadcasted_iota(jnp.int32, (b_blk, c_blk), 1)

    if mask_needed:
        # Only emitted when C % c_blk != 0; a no-op select on non-last blocks.
        n_valid = num_classes - c * c_blk
        logits = jnp.where(lcol < n_valid, logits, _NEG_INF)

    # ---- running target logit (targets assumed in [0, num_classes)) ----
    is_tgt = lcol == (tgt_ref[...] - c * c_blk)              # (b_blk, c_blk)
    tl_ref[...] += jnp.sum(jnp.where(is_tgt, logits, 0.0), axis=1, keepdims=True)

    # ---- online softmax accumulators ----
    bmax = jnp.max(logits, axis=1, keepdims=True)
    m_prev = m_ref[...]
    m_new = jnp.maximum(m_prev, bmax)
    l_ref[...] = (l_ref[...] * jnp.exp(m_prev - m_new)
                  + jnp.sum(jnp.exp(logits - m_new), axis=1, keepdims=True))
    m_ref[...] = m_new

    if use_smooth:
        # ---- streaming top-k: block picks merged straight into the carry ----
        carry = topk_ref[...]                                # (b_blk, knn) read once
        kcol = lax.broadcasted_iota(jnp.int32, (b_blk, knn), 1)
        vals = logits
        mx = bmax                                            # reuse block max as pick 0
        for i in range(knn):
            if i > 0:
                mx = jnp.max(vals, axis=1, keepdims=True)
            # knock out only the FIRST occurrence of the max (ties -> lowest index)
            first = jnp.min(jnp.where(vals == mx, lcol, c_blk),
                            axis=1, keepdims=True)
            vals = jnp.where(lcol == first, _NEG_INF, vals)
            # insert pick into carry: replace current min if the pick beats it
            cmin = jnp.min(carry, axis=1, keepdims=True)
            cmin_pos = jnp.min(jnp.where(carry == cmin, kcol, knn),
                               axis=1, keepdims=True)
            replace = (mx > cmin) & (kcol == cmin_pos)
            carry = jnp.where(replace, mx, carry)
        topk_ref[...] = carry                                # write once

    # ---- finalize per-row loss on the last C step ----
    @pl.when(c == n_c - 1)
    def _():
        lse = m_ref[...] + jnp.log(l_ref[...])
        tl = tl_ref[...]
        if use_smooth:
            tk = topk_ref[...]                               # global top-k values
            topk_sum = jnp.sum(tk, axis=1, keepdims=True)
            kth = jnp.min(tk, axis=1, keepdims=True)
            ind = (tl >= kth).astype(jnp.float32)            # target in top-k?
            wsum = (topk_sum - ind * tl) * (1.0 / knn) + tl
            lsum = (knn - ind) * (1.0 / knn) + 1.0
            out_ref[...] = -(wsum - lsum * lse)
        else:
            out_ref[...] = -(tl - lse)


def _round_up(x, m):
    return (x + m - 1) // m * m


def invnet_forward(inputs, targets, em, *, beta=0.05, knn=6, epoch=0,
                   b_blk=None, c_blk=None):
    """InvNet forward. Returns scalar f32 loss."""
    inputs = jnp.asarray(inputs, jnp.float32)
    em = jnp.asarray(em, jnp.float32)
    B, F = inputs.shape
    C, F2 = em.shape
    assert F == F2, (F, F2)
    use_smooth = (knn > 0) and (epoch is not None) and (epoch > 4)
    if use_smooth:
        assert knn <= C, "knn must not exceed the number of classes"

    # Tile selection per review: maximize rows per em sweep (minimum em HBM
    # traffic / big MXU LHS), wide class tiles for full DMA bursts.
    if b_blk is None:
        b_blk = min(256, _round_up(B, 8))
    if c_blk is None:
        c_blk = min(512, _round_up(C, 128))

    B_pad = _round_up(B, b_blk)
    C_pad = _round_up(C, c_blk)
    F_pad = _round_up(F, 128)          # keep the lane (contraction) dim dense

    # Pre-scale by 1/beta and cast to bf16 once in the wrapper (x sits on the
    # reduction axis, so an in-kernel scale/cast would be repeated n_c times).
    x = (inputs * (1.0 / beta)).astype(jnp.bfloat16)
    x = jnp.pad(x, ((0, B_pad - B), (0, F_pad - F)))
    em_b = jnp.pad(em.astype(jnp.bfloat16), ((0, C_pad - C), (0, F_pad - F)))
    tgt = jnp.pad(targets.astype(jnp.int32).reshape(B, 1),
                  ((0, B_pad - B), (0, 0)))

    n_b, n_c = B_pad // b_blk, C_pad // c_blk
    kernel = functools.partial(
        _invnet_kernel, knn=int(knn), use_smooth=use_smooth,
        num_classes=C, c_blk=c_blk, mask_needed=(C_pad != C))

    # Explicit VMEM budget: double-buffered bf16 em + x tiles, f32 logits
    # intermediate + epilogue temps, scratch headroom. Capped v7x-safe.
    est = (2 * c_blk * F_pad * 2 + 2 * b_blk * F_pad * 2
           + 4 * b_blk * c_blk * 4 + (4 << 20))
    vmem_limit = int(min(max(est, 32 << 20), 48 << 20))

    per_row = pl.pallas_call(
        kernel,
        out_shape=jax.ShapeDtypeStruct((B_pad, 1), jnp.float32),
        grid_spec=pltpu.PrefetchScalarGridSpec(
            num_scalar_prefetch=0,
            grid=(n_b, n_c),
            in_specs=[
                pl.BlockSpec((b_blk, F_pad), lambda b, c: (b, 0)),  # x (bf16, resident per sweep)
                pl.BlockSpec((c_blk, F_pad), lambda b, c: (c, 0)),  # em (bf16, streamed)
                pl.BlockSpec((b_blk, 1), lambda b, c: (b, 0)),      # targets (int32)
            ],
            out_specs=pl.BlockSpec((b_blk, 1), lambda b, c: (b, 0)),
            scratch_shapes=[
                pltpu.VMEM((b_blk, 1), jnp.float32),                 # running max m
                pltpu.VMEM((b_blk, 1), jnp.float32),                 # running sum-exp l
                pltpu.VMEM((b_blk, 1), jnp.float32),                 # target logit
                pltpu.VMEM((b_blk, max(int(knn), 1)), jnp.float32),  # top-k carry
            ]),
        compiler_params=pltpu.CompilerParams(
            dimension_semantics=("parallel", "arbitrary"),
            vmem_limit_bytes=vmem_limit),
    )(x, em_b, tgt)
    return jnp.mean(per_row[:B, 0])


def _reference_forward(inputs, targets, em, *, beta=0.05, knn=6, epoch=0):
    """Pure-JAX reference matching the PyTorch forward (same bf16 operands)."""
    xq = (jnp.asarray(inputs, jnp.float32) * (1.0 / beta)).astype(jnp.bfloat16)
    emq = jnp.asarray(em, jnp.float32).astype(jnp.bfloat16)
    logits = lax.dot_general(xq, emq, (((1,), (1,)), ((), ())),
                             preferred_element_type=jnp.float32)
    B, C = logits.shape
    log_probs = jax.nn.log_softmax(logits, axis=1)
    if knn > 0 and epoch > 4:
        _, idx = lax.top_k(logits, knn)
        onehot = jnp.zeros((B, C), jnp.float32)
        onehot = jax.vmap(lambda o, i: o.at[i].set(1.0 / knn))(onehot, idx)
        onehot = jax.vmap(lambda o, t: o.at[t].set(1.0))(onehot, targets)
        return jnp.mean(-jnp.sum(onehot * log_probs, axis=1))
    return jnp.mean(-log_probs[jnp.arange(B), targets])


if __name__ == "__main__":
    key = jax.random.PRNGKey(0)
    B, num_features, num_classes = 12, 128, 320   # exercises B and C padding
    beta, knn = 0.05, 6

    k1, k2, k3 = jax.random.split(key, 3)
    # Module's __init__ zeros the exemplar memory; use deterministic random
    # row-normalized values so the forward is non-degenerate.
    inputs = jax.random.normal(k1, (B, num_features), jnp.float32)
    inputs = inputs / jnp.linalg.norm(inputs, axis=1, keepdims=True)
    em = jax.random.normal(k2, (num_classes, num_features), jnp.float32)
    em = em / jnp.linalg.norm(em, axis=1, keepdims=True)
    targets = jax.random.randint(k3, (B,), 0, num_classes, jnp.int32)

    # Branch 1: epoch > 4  -> smooth (soft-label) loss
    loss_smooth = invnet_forward(inputs, targets, em,
                                 beta=beta, knn=knn, epoch=10)
    jax.block_until_ready(loss_smooth)
    ref_smooth = _reference_forward(inputs, targets, em,
                                    beta=beta, knn=knn, epoch=10)
    assert jnp.allclose(loss_smooth, ref_smooth, atol=2e-3, rtol=2e-3), (
        loss_smooth, ref_smooth)

    # Branch 2: epoch <= 4 -> standard cross entropy
    loss_ce = invnet_forward(inputs, targets, em,
                             beta=beta, knn=knn, epoch=2)
    jax.block_until_ready(loss_ce)
    ref_ce = _reference_forward(inputs, targets, em,
                                beta=beta, knn=knn, epoch=2)
    assert jnp.allclose(loss_ce, ref_ce, atol=2e-3, rtol=2e-3), (loss_ce, ref_ce)

    # TODO(synk): ExemplarMemory.backward's in-place memory-bank update
    # (em[y] = alpha*em[y] + (1-alpha)*x, renormalized) is a training-time
    # autograd side effect, not part of the forward pass.
    print("KERNEL_OK")
</pallas_src>

<mosaic_0001>
module attributes {stable_mosaic.version = 11 : i64} {
  func.func @_invnet_kernel(%arg0: i32, %arg1: i32, %arg2: memref<16x128xbf16, #tpu.memory_space<vmem>>, %arg3: memref<384x128xbf16, #tpu.memory_space<vmem>>, %arg4: memref<16x1xi32, #tpu.memory_space<vmem>>, %arg5: memref<16x1xf32, #tpu.memory_space<vmem>>, %arg6: memref<16x1xf32, #tpu.memory_space<vmem>>, %arg7: memref<16x1xf32, #tpu.memory_space<vmem>>, %arg8: memref<16x1xf32, #tpu.memory_space<vmem>>, %arg9: memref<16x6xf32, #tpu.memory_space<vmem>>) attributes {dimension_semantics = [#tpu.dimension_semantics<parallel>, #tpu.dimension_semantics<arbitrary>], iteration_bounds = array<i64: 1, 1>, scalar_prefetch = 0 : i64, scratch_operands = 4 : i64, tpu.core_type = #tpu.core_type<tc>, window_params = [{transform_indices = @transform_0, window_bounds = array<i64: 16, 128>}, {transform_indices = @transform_1, window_bounds = array<i64: 384, 128>}, {transform_indices = @transform_2, window_bounds = array<i64: 16, 1>}, {transform_indices = @transform_3, window_bounds = array<i64: 16, 1>}]} {
    %c0_i32 = arith.constant 0 : i32
    %0 = arith.cmpi eq, %arg1, %c0_i32 : i32
    %1 = arith.extui %0 : i1 to i32
    %c0_i32_0 = arith.constant 0 : i32
    %2 = arith.cmpi ne, %1, %c0_i32_0 : i32
    scf.if %2 {
      %cst_67 = arith.constant 0xFF800000 : f32
      %204 = vector.broadcast %cst_67 : f32 to vector<16x1xf32>
      %c0_68 = arith.constant 0 : index
      %c0_69 = arith.constant 0 : index
      %205 = vector.load %arg6[%c0_68, %c0_69] : memref<16x1xf32, #tpu.memory_space<vmem>>, vector<16x1xf32>
      tpu.vector_store %arg6[%c0_68, %c0_69], %204 {strides = array<i32>} : memref<16x1xf32, #tpu.memory_space<vmem>>, vector<16x1xf32>,
      %cst_70 = arith.constant 0.000000e+00 : f32
      %206 = vector.broadcast %cst_70 : f32 to vector<16x1xf32>
      %c0_71 = arith.constant 0 : index
      %c0_72 = arith.constant 0 : index
      %207 = vector.load %arg7[%c0_71, %c0_72] : memref<16x1xf32, #tpu.memory_space<vmem>>, vector<16x1xf32>
      tpu.vector_store %arg7[%c0_71, %c0_72], %206 {strides = array<i32>} : memref<16x1xf32, #tpu.memory_space<vmem>>, vector<16x1xf32>,
      %cst_73 = arith.constant 0.000000e+00 : f32
      %208 = vector.broadcast %cst_73 : f32 to vector<16x1xf32>
      %c0_74 = arith.constant 0 : index
      %c0_75 = arith.constant 0 : index
      %209 = vector.load %arg8[%c0_74, %c0_75] : memref<16x1xf32, #tpu.memory_space<vmem>>, vector<16x1xf32>
      tpu.vector_store %arg8[%c0_74, %c0_75], %208 {strides = array<i32>} : memref<16x1xf32, #tpu.memory_space<vmem>>, vector<16x1xf32>,
      %cst_76 = arith.constant 0xFF800000 : f32
      %210 = vector.broadcast %cst_76 : f32 to vector<16x6xf32>
      %c0_77 = arith.constant 0 : index
      %c0_78 = arith.constant 0 : index
      %211 = vector.load %arg9[%c0_77, %c0_78] : memref<16x6xf32, #tpu.memory_space<vmem>>, vector<16x6xf32>
      tpu.vector_store %arg9[%c0_77, %c0_78], %210 {strides = array<i32>} : memref<16x6xf32, #tpu.memory_space<vmem>>, vector<16x6xf32>,
    } else {
    }
    %c0 = arith.constant 0 : index
    %c0_1 = arith.constant 0 : index
    %3 = vector.load %arg2[%c0, %c0_1] : memref<16x128xbf16, #tpu.memory_space<vmem>>, vector<16x128xbf16>
    %c0_2 = arith.constant 0 : index
    %c0_3 = arith.constant 0 : index
    %4 = vector.load %arg3[%c0_2, %c0_3] : memref<384x128xbf16, #tpu.memory_space<vmem>>, vector<384x128xbf16>
    %cst = arith.constant dense<0.000000e+00> : vector<16x384xf32>
    %5 = tpu.matmul %3, %4, %cst {dimension_numbers = #tpu.dot_dimension_numbers<[1], [1], [0], [0], [0, 0, 1, 0], [], []>} : vector<16x128xbf16>, vector<384x128xbf16>, vector<16x384xf32> -> vector<16x384xf32>
    %6 = tpu.iota {dimensions = array<i32: 1>} : vector<16x384xi32>
    %c384_i32 = arith.constant 384 : i32
    %7 = arith.muli %arg1, %c384_i32 : i32
    %c320_i32 = arith.constant 320 : i32
    %8 = arith.subi %c320_i32, %7 : i32
    %9 = vector.broadcast %8 : i32 to vector<16x384xi32>
    %10 = arith.cmpi slt, %6, %9 : vector<16x384xi32>
    %cst_4 = arith.constant 0xFF800000 : f32
    %11 = vector.broadcast %cst_4 : f32 to vector<16x384xf32>
    %12 = arith.select %10, %5, %11 : vector<16x384xi1>, vector<16x384xf32>
    %c0_5 = arith.constant 0 : index
    %c0_6 = arith.constant 0 : index
    %13 = vector.load %arg4[%c0_5, %c0_6] : memref<16x1xi32, #tpu.memory_space<vmem>>, vector<16x1xi32>
    %c384_i32_7 = arith.constant 384 : i32
    %14 = arith.muli %arg1, %c384_i32_7 : i32
    %15 = vector.broadcast %14 : i32 to vector<16x1xi32>
    %16 = arith.subi %13, %15 : vector<16x1xi32>
    %17 = vector.broadcast %16 : vector<16x1xi32> to vector<16x384xi32>
    %18 = arith.cmpi eq, %6, %17 : vector<16x384xi32>
    %c0_8 = arith.constant 0 : index
    %c0_9 = arith.constant 0 : index
    %19 = vector.load %arg8[%c0_8, %c0_9] : memref<16x1xf32, #tpu.memory_space<vmem>>, vector<16x1xf32>
    %cst_10 = arith.constant 0.000000e+00 : f32
    %20 = vector.broadcast %cst_10 : f32 to vector<16x384xf32>
    %21 = arith.select %18, %12, %20 : vector<16x384xi1>, vector<16x384xf32>
    %cst_11 = arith.constant dense<0.000000e+00> : vector<16xf32>
    %22 = vector.multi_reduction <add>, %21, %cst_11 [1] : vector<16x384xf32> to vector<16xf32>
    %23 = vector.shape_cast %22 : vector<16xf32> to vector<16x1xf32>
    %24 = arith.addf %19, %23 : vector<16x1xf32>
    %c0_12 = arith.constant 0 : index
    %c0_13 = arith.constant 0 : index
    %25 = vector.load %arg8[%c0_12, %c0_13] : memref<16x1xf32, #tpu.memory_space<vmem>>, vector<16x1xf32>
    tpu.vector_store %arg8[%c0_12, %c0_13], %24 {strides = array<i32>} : memref<16x1xf32, #tpu.memory_space<vmem>>, vector<16x1xf32>,
    %cst_14 = arith.constant dense<0xFF800000> : vector<16xf32>
    %26 = vector.multi_reduction <maximumf>, %12, %cst_14 [1] : vector<16x384xf32> to vector<16xf32>
    %27 = vector.shape_cast %26 : vector<16xf32> to vector<16x1xf32>
    %c0_15 = arith.constant 0 : index
    %c0_16 = arith.constant 0 : index
    %28 = vector.load %arg6[%c0_15, %c0_16] : memref<16x1xf32, #tpu.memory_space<vmem>>, vector<16x1xf32>
    %29 = arith.maximumf %28, %27 : vector<16x1xf32>
    %c0_17 = arith.constant 0 : index
    %c0_18 = arith.constant 0 : index
    %30 = vector.load %arg7[%c0_17, %c0_18] : memref<16x1xf32, #tpu.memory_space<vmem>>, vector<16x1xf32>
    %31 = arith.subf %28, %29 : vector<16x1xf32>
    %32 = math.exp %31 : vector<16x1xf32>
    %33 = arith.mulf %30, %32 : vector<16x1xf32>
    %34 = vector.broadcast %29 : vector<16x1xf32> to vector<16x384xf32>
    %35 = arith.subf %12, %34 : vector<16x384xf32>
    %36 = math.exp %35 : vector<16x384xf32>
    %cst_19 = arith.constant dense<0.000000e+00> : vector<16xf32>
    %37 = vector.multi_reduction <add>, %36, %cst_19 [1] : vector<16x384xf32> to vector<16xf32>
    %38 = vector.shape_cast %37 : vector<16xf32> to vector<16x1xf32>
    %39 = arith.addf %33, %38 : vector<16x1xf32>
    %c0_20 = arith.constant 0 : index
    %c0_21 = arith.constant 0 : index
    %40 = vector.load %arg7[%c0_20, %c0_21] : memref<16x1xf32, #tpu.memory_space<vmem>>, vector<16x1xf32>
    tpu.vector_store %arg7[%c0_20, %c0_21], %39 {strides = array<i32>} : memref<16x1xf32, #tpu.memory_space<vmem>>, vector<16x1xf32>,
    %c0_22 = arith.constant 0 : index
    %c0_23 = arith.constant 0 : index
    %41 = vector.load %arg6[%c0_22, %c0_23] : memref<16x1xf32, #tpu.memory_space<vmem>>, vector<16x1xf32>
    tpu.vector_store %arg6[%c0_22, %c0_23], %29 {strides = array<i32>} : memref<16x1xf32, #tpu.memory_space<vmem>>, vector<16x1xf32>,
    %c0_24 = arith.constant 0 : index
    %c0_25 = arith.constant 0 : index
    %42 = vector.load %arg9[%c0_24, %c0_25] : memref<16x6xf32, #tpu.memory_space<vmem>>, vector<16x6xf32>
    %43 = tpu.iota {dimensions = array<i32: 1>} : vector<16x6xi32>
    %44 = vector.broadcast %27 : vector<16x1xf32> to vector<16x384xf32>
    %45 = arith.cmpf oeq, %12, %44 : vector<16x384xf32>
    %c384_i32_26 = arith.constant 384 : i32
    %46 = vector.broadcast %c384_i32_26 : i32 to vector<16x384xi32>
    %47 = arith.select %45, %6, %46 : vector<16x384xi1>, vector<16x384xi32>
    %cst_27 = arith.constant dense<2147483647> : vector<16xi32>
    %48 = vector.multi_reduction <minsi>, %47, %cst_27 [1] : vector<16x384xi32> to vector<16xi32>
    %49 = vector.shape_cast %48 : vector<16xi32> to vector<16x1xi32>
    %50 = vector.broadcast %49 : vector<16x1xi32> to vector<16x384xi32>
    %51 = arith.cmpi eq, %6, %50 : vector<16x384xi32>
    %cst_28 = arith.constant 0xFF800000 : f32
    %52 = vector.broadcast %cst_28 : f32 to vector<16x384xf32>
    %53 = arith.select %51, %52, %12 : vector<16x384xi1>, vector<16x384xf32>
    %cst_29 = arith.constant dense<0x7F800000> : vector<16xf32>
    %54 = vector.multi_reduction <minimumf>, %42, %cst_29 [1] : vector<16x6xf32> to vector<16xf32>
    %55 = vector.shape_cast %54 : vector<16xf32> to vector<16x1xf32>
    %56 = vector.broadcast %55 : vector<16x1xf32> to vector<16x6xf32>
    %57 = arith.cmpf oeq, %42, %56 : vector<16x6xf32>
    %c6_i32 = arith.constant 6 : i32
    %58 = vector.broadcast %c6_i32 : i32 to vector<16x6xi32>
    %59 = arith.select %57, %43, %58 : vector<16x6xi1>, vector<16x6xi32>
    %cst_30 = arith.constant dense<2147483647> : vector<16xi32>
    %60 = vector.multi_reduction <minsi>, %59, %cst_30 [1] : vector<16x6xi32> to vector<16xi32>
    %61 = vector.shape_cast %60 : vector<16xi32> to vector<16x1xi32>
    %62 = arith.cmpf ogt, %27, %55 : vector<16x1xf32>
    %63 = vector.broadcast %61 : vector<16x1xi32> to vector<16x6xi32>
    %64 = arith.cmpi eq, %43, %63 : vector<16x6xi32>
    %65 = vector.broadcast %62 : vector<16x1xi1> to vector<16x6xi1>
    %66 = arith.andi %65, %64 : vector<16x6xi1>
    %67 = vector.shape_cast %27 : vector<16x1xf32> to vector<16x1xf32>
    %68 = vector.broadcast %67 : vector<16x1xf32> to vector<16x6xf32>
    %69 = arith.select %66, %68, %42 : vector<16x6xi1>, vector<16x6xf32>
    %cst_31 = arith.constant dense<0xFF800000> : vector<16xf32>
    %70 = vector.multi_reduction <maximumf>, %53, %cst_31 [1] : vector<16x384xf32> to vector<16xf32>
    %71 = vector.shape_cast %70 : vector<16xf32> to vector<16x1xf32>
    %72 = vector.broadcast %71 : vector<16x1xf32> to vector<16x384xf32>
    %73 = arith.cmpf oeq, %53, %72 : vector<16x384xf32>
    %c384_i32_32 = arith.constant 384 : i32
    %74 = vector.broadcast %c384_i32_32 : i32 to vector<16x384xi32>
    %75 = arith.select %73, %6, %74 : vector<16x384xi1>, vector<16x384xi32>
    %cst_33 = arith.constant dense<2147483647> : vector<16xi32>
    %76 = vector.multi_reduction <minsi>, %75, %cst_33 [1] : vector<16x384xi32> to vector<16xi32>
    %77 = vector.shape_cast %76 : vector<16xi32> to vector<16x1xi32>
    %78 = vector.broadcast %77 : vector<16x1xi32> to vector<16x384xi32>
    %79 = arith.cmpi eq, %6, %78 : vector<16x384xi32>
    %cst_34 = arith.constant 0xFF800000 : f32
    %80 = vector.broadcast %cst_34 : f32 to vector<16x384xf32>
    %81 = arith.select %79, %80, %53 : vector<16x384xi1>, vector<16x384xf32>
    %cst_35 = arith.constant dense<0x7F800000> : vector<16xf32>
    %82 = vector.multi_reduction <minimumf>, %69, %cst_35 [1] : vector<16x6xf32> to vector<16xf32>
    %83 = vector.shape_cast %82 : vector<16xf32> to vector<16x1xf32>
    %84 = vector.broadcast %83 : vector<16x1xf32> to vector<16x6xf32>
    %85 = arith.cmpf oeq, %69, %84 : vector<16x6xf32>
    %c6_i32_36 = arith.constant 6 : i32
    %86 = vector.broadcast %c6_i32_36 : i32 to vector<16x6xi32>
    %87 = arith.select %85, %43, %86 : vector<16x6xi1>, vector<16x6xi32>
    %cst_37 = arith.constant dense<2147483647> : vector<16xi32>
    %88 = vector.multi_reduction <minsi>, %87, %cst_37 [1] : vector<16x6xi32> to vector<16xi32>
    %89 = vector.shape_cast %88 : vector<16xi32> to vector<16x1xi32>
    %90 = arith.cmpf ogt, %71, %83 : vector<16x1xf32>
    %91 = vector.broadcast %89 : vector<16x1xi32> to vector<16x6xi32>
    %92 = arith.cmpi eq, %43, %91 : vector<16x6xi32>
    %93 = vector.broadcast %90 : vector<16x1xi1> to vector<16x6xi1>
    %94 = arith.andi %93, %92 : vector<16x6xi1>
    %95 = vector.shape_cast %71 : vector<16x1xf32> to vector<16x1xf32>
    %96 = vector.broadcast %95 : vector<16x1xf32> to vector<16x6xf32>
    %97 = arith.select %94, %96, %69 : vector<16x6xi1>, vector<16x6xf32>
    %cst_38 = arith.constant dense<0xFF800000> : vector<16xf32>
    %98 = vector.multi_reduction <maximumf>, %81, %cst_38 [1] : vector<16x384xf32> to vector<16xf32>
    %99 = vector.shape_cast %98 : vector<16xf32> to vector<16x1xf32>
    %100 = vector.broadcast %99 : vector<16x1xf32> to vector<16x384xf32>
    %101 = arith.cmpf oeq, %81, %100 : vector<16x384xf32>
    %c384_i32_39 = arith.constant 384 : i32
    %102 = vector.broadcast %c384_i32_39 : i32 to vector<16x384xi32>
    %103 = arith.select %101, %6, %102 : vector<16x384xi1>, vector<16x384xi32>
    %cst_40 = arith.constant dense<2147483647> : vector<16xi32>
    %104 = vector.multi_reduction <minsi>, %103, %cst_40 [1] : vector<16x384xi32> to vector<16xi32>
    %105 = vector.shape_cast %104 : vector<16xi32> to vector<16x1xi32>
    %106 = vector.broadcast %105 : vector<16x1xi32> to vector<16x384xi32>
    %107 = arith.cmpi eq, %6, %106 : vector<16x384xi32>
    %cst_41 = arith.constant 0xFF800000 : f32
    %108 = vector.broadcast %cst_41 : f32 to vector<16x384xf32>
    %109 = arith.select %107, %108, %81 : vector<16x384xi1>, vector<16x384xf32>
    %cst_42 = arith.constant dense<0x7F800000> : vector<16xf32>
    %110 = vector.multi_reduction <minimumf>, %97, %cst_42 [1] : vector<16x6xf32> to vector<16xf32>
    %111 = vector.shape_cast %110 : vector<16xf32> to vector<16x1xf32>
    %112 = vector.broadcast %111 : vector<16x1xf32> to vector<16x6xf32>
    %113 = arith.cmpf oeq, %97, %112 : vector<16x6xf32>
    %c6_i32_43 = arith.constant 6 : i32
    %114 = vector.broadcast %c6_i32_43 : i32 to vector<16x6xi32>
    %115 = arith.select %113, %43, %114 : vector<16x6xi1>, vector<16x6xi32>
    %cst_44 = arith.constant dense<2147483647> : vector<16xi32>
    %116 = vector.multi_reduction <minsi>, %115, %cst_44 [1] : vector<16x6xi32> to vector<16xi32>
    %117 = vector.shape_cast %116 : vector<16xi32> to vector<16x1xi32>
    %118 = arith.cmpf ogt, %99, %111 : vector<16x1xf32>
    %119 = vector.broadcast %117 : vector<16x1xi32> to vector<16x6xi32>
    %120 = arith.cmpi eq, %43, %119 : vector<16x6xi32>
    %121 = vector.broadcast %118 : vector<16x1xi1> to vector<16x6xi1>
    %122 = arith.andi %121, %120 : vector<16x6xi1>
    %123 = vector.shape_cast %99 : vector<16x1xf32> to vector<16x1xf32>
    %124 = vector.broadcast %123 : vector<16x1xf32> to vector<16x6xf32>
    %125 = arith.select %122, %124, %97 : vector<16x6xi1>, vector<16x6xf32>
    %cst_45 = arith.constant dense<0xFF800000> : vector<16xf32>
    %126 = vector.multi_reduction <maximumf>, %109, %cst_45 [1] : vector<16x384xf32> to vector<16xf32>
    %127 = vector.shape_cast %126 : vector<16xf32> to vector<16x1xf32>
    %128 = vector.broadcast %127 : vector<16x1xf32> to vector<16x384xf32>
    %129 = arith.cmpf oeq, %109, %128 : vector<16x384xf32>
    %c384_i32_46 = arith.constant 384 : i32
    %130 = vector.broadcast %c384_i32_46 : i32 to vector<16x384xi32>
    %131 = arith.select %129, %6, %130 : vector<16x384xi1>, vector<16x384xi32>
    %cst_47 = arith.constant dense<2147483647> : vector<16xi32>
    %132 = vector.multi_reduction <minsi>, %131, %cst_47 [1] : vector<16x384xi32> to vector<16xi32>
    %133 = vector.shape_cast %132 : vector<16xi32> to vector<16x1xi32>
    %134 = vector.broadcast %133 : vector<16x1xi32> to vector<16x384xi32>
    %135 = arith.cmpi eq, %6, %134 : vector<16x384xi32>
    %cst_48 = arith.constant 0xFF800000 : f32
    %136 = vector.broadcast %cst_48 : f32 to vector<16x384xf32>
    %137 = arith.select %135, %136, %109 : vector<16x384xi1>, vector<16x384xf32>
    %cst_49 = arith.constant dense<0x7F800000> : vector<16xf32>
    %138 = vector.multi_reduction <minimumf>, %125, %cst_49 [1] : vector<16x6xf32> to vector<16xf32>
    %139 = vector.shape_cast %138 : vector<16xf32> to vector<16x1xf32>
    %140 = vector.broadcast %139 : vector<16x1xf32> to vector<16x6xf32>
    %141 = arith.cmpf oeq, %125, %140 : vector<16x6xf32>
    %c6_i32_50 = arith.constant 6 : i32
    %142 = vector.broadcast %c6_i32_50 : i32 to vector<16x6xi32>
    %143 = arith.select %141, %43, %142 : vector<16x6xi1>, vector<16x6xi32>
    %cst_51 = arith.constant dense<2147483647> : vector<16xi32>
    %144 = vector.multi_reduction <minsi>, %143, %cst_51 [1] : vector<16x6xi32> to vector<16xi32>
    %145 = vector.shape_cast %144 : vector<16xi32> to vector<16x1xi32>
    %146 = arith.cmpf ogt, %127, %139 : vector<16x1xf32>
    %147 = vector.broadcast %145 : vector<16x1xi32> to vector<16x6xi32>
    %148 = arith.cmpi eq, %43, %147 : vector<16x6xi32>
    %149 = vector.broadcast %146 : vector<16x1xi1> to vector<16x6xi1>
    %150 = arith.andi %149, %148 : vector<16x6xi1>
    %151 = vector.shape_cast %127 : vector<16x1xf32> to vector<16x1xf32>
    %152 = vector.broadcast %151 : vector<16x1xf32> to vector<16x6xf32>
    %153 = arith.select %150, %152, %125 : vector<16x6xi1>, vector<16x6xf32>
    %cst_52 = arith.constant dense<0xFF800000> : vector<16xf32>
    %154 = vector.multi_reduction <maximumf>, %137, %cst_52 [1] : vector<16x384xf32> to vector<16xf32>
    %155 = vector.shape_cast %154 : vector<16xf32> to vector<16x1xf32>
    %156 = vector.broadcast %155 : vector<16x1xf32> to vector<16x384xf32>
    %157 = arith.cmpf oeq, %137, %156 : vector<16x384xf32>
    %c384_i32_53 = arith.constant 384 : i32
    %158 = vector.broadcast %c384_i32_53 : i32 to vector<16x384xi32>
    %159 = arith.select %157, %6, %158 : vector<16x384xi1>, vector<16x384xi32>
    %cst_54 = arith.constant dense<2147483647> : vector<16xi32>
    %160 = vector.multi_reduction <minsi>, %159, %cst_54 [1] : vector<16x384xi32> to vector<16xi32>
    %161 = vector.shape_cast %160 : vector<16xi32> to vector<16x1xi32>
    %162 = vector.broadcast %161 : vector<16x1xi32> to vector<16x384xi32>
    %163 = arith.cmpi eq, %6, %162 : vector<16x384xi32>
    %cst_55 = arith.constant 0xFF800000 : f32
    %164 = vector.broadcast %cst_55 : f32 to vector<16x384xf32>
    %165 = arith.select %163, %164, %137 : vector<16x384xi1>, vector<16x384xf32>
    %cst_56 = arith.constant dense<0x7F800000> : vector<16xf32>
    %166 = vector.multi_reduction <minimumf>, %153, %cst_56 [1] : vector<16x6xf32> to vector<16xf32>
    %167 = vector.shape_cast %166 : vector<16xf32> to vector<16x1xf32>
    %168 = vector.broadcast %167 : vector<16x1xf32> to vector<16x6xf32>
    %169 = arith.cmpf oeq, %153, %168 : vector<16x6xf32>
    %c6_i32_57 = arith.constant 6 : i32
    %170 = vector.broadcast %c6_i32_57 : i32 to vector<16x6xi32>
    %171 = arith.select %169, %43, %170 : vector<16x6xi1>, vector<16x6xi32>
    %cst_58 = arith.constant dense<2147483647> : vector<16xi32>
    %172 = vector.multi_reduction <minsi>, %171, %cst_58 [1] : vector<16x6xi32> to vector<16xi32>
    %173 = vector.shape_cast %172 : vector<16xi32> to vector<16x1xi32>
    %174 = arith.cmpf ogt, %155, %167 : vector<16x1xf32>
    %175 = vector.broadcast %173 : vector<16x1xi32> to vector<16x6xi32>
    %176 = arith.cmpi eq, %43, %175 : vector<16x6xi32>
    %177 = vector.broadcast %174 : vector<16x1xi1> to vector<16x6xi1>
    %178 = arith.andi %177, %176 : vector<16x6xi1>
    %179 = vector.shape_cast %155 : vector<16x1xf32> to vector<16x1xf32>
    %180 = vector.broadcast %179 : vector<16x1xf32> to vector<16x6xf32>
    %181 = arith.select %178, %180, %153 : vector<16x6xi1>, vector<16x6xf32>
    %cst_59 = arith.constant dense<0xFF800000> : vector<16xf32>
    %182 = vector.multi_reduction <maximumf>, %165, %cst_59 [1] : vector<16x384xf32> to vector<16xf32>
    %183 = vector.shape_cast %182 : vector<16xf32> to vector<16x1xf32>
    %cst_60 = arith.constant dense<0x7F800000> : vector<16xf32>
    %184 = vector.multi_reduction <minimumf>, %181, %cst_60 [1] : vector<16x6xf32> to vector<16xf32>
    %185 = vector.shape_cast %184 : vector<16xf32> to vector<16x1xf32>
    %186 = vector.broadcast %185 : vector<16x1xf32> to vector<16x6xf32>
    %187 = arith.cmpf oeq, %181, %186 : vector<16x6xf32>
    %c6_i32_61 = arith.constant 6 : i32
    %188 = vector.broadcast %c6_i32_61 : i32 to vector<16x6xi32>
    %189 = arith.select %187, %43, %188 : vector<16x6xi1>, vector<16x6xi32>
    %cst_62 = arith.constant dense<2147483647> : vector<16xi32>
    %190 = vector.multi_reduction <minsi>, %189, %cst_62 [1] : vector<16x6xi32> to vector<16xi32>
    %191 = vector.shape_cast %190 : vector<16xi32> to vector<16x1xi32>
    %192 = arith.cmpf ogt, %183, %185 : vector<16x1xf32>
    %193 = vector.broadcast %191 : vector<16x1xi32> to vector<16x6xi32>
    %194 = arith.cmpi eq, %43, %193 : vector<16x6xi32>
    %195 = vector.broadcast %192 : vector<16x1xi1> to vector<16x6xi1>
    %196 = arith.andi %195, %194 : vector<16x6xi1>
    %197 = vector.shape_cast %183 : vector<16x1xf32> to vector<16x1xf32>
    %198 = vector.broadcast %197 : vector<16x1xf32> to vector<16x6xf32>
    %199 = arith.select %196, %198, %181 : vector<16x6xi1>, vector<16x6xf32>
    %c0_63 = arith.constant 0 : index
    %c0_64 = arith.constant 0 : index
    %200 = vector.load %arg9[%c0_63, %c0_64] : memref<16x6xf32, #tpu.memory_space<vmem>>, vector<16x6xf32>
    tpu.vector_store %arg9[%c0_63, %c0_64], %199 {strides = array<i32>} : memref<16x6xf32, #tpu.memory_space<vmem>>, vector<16x6xf32>,
    %c0_i32_65 = arith.constant 0 : i32
    %201 = arith.cmpi eq, %arg1, %c0_i32_65 : i32
    %202 = arith.extui %201 : i1 to i32
    %c0_i32_66 = arith.constant 0 : i32
    %203 = arith.cmpi ne, %202, %c0_i32_66 : i32
    scf.if %203 {
      %c0_67 = arith.constant 0 : index
      %c0_68 = arith.constant 0 : index
      %204 = vector.load %arg6[%c0_67, %c0_68] : memref<16x1xf32, #tpu.memory_space<vmem>>, vector<16x1xf32>
      %c0_69 = arith.constant 0 : index
      %c0_70 = arith.constant 0 : index
      %205 = vector.load %arg7[%c0_69, %c0_70] : memref<16x1xf32, #tpu.memory_space<vmem>>, vector<16x1xf32>
      %206 = math.log %205 : vector<16x1xf32>
      %207 = arith.addf %204, %206 : vector<16x1xf32>
      %c0_71 = arith.constant 0 : index
      %c0_72 = arith.constant 0 : index
      %208 = vector.load %arg8[%c0_71, %c0_72] : memref<16x1xf32, #tpu.memory_space<vmem>>, vector<16x1xf32>
      %c0_73 = arith.constant 0 : index
      %c0_74 = arith.constant 0 : index
      %209 = vector.load %arg9[%c0_73, %c0_74] : memref<16x6xf32, #tpu.memory_space<vmem>>, vector<16x6xf32>
      %cst_75 = arith.constant dense<0.000000e+00> : vector<16xf32>
      %210 = vector.multi_reduction <add>, %209, %cst_75 [1] : vector<16x6xf32> to vector<16xf32>
      %211 = vector.shape_cast %210 : vector<16xf32> to vector<16x1xf32>
      %cst_76 = arith.constant dense<0x7F800000> : vector<16xf32>
      %212 = vector.multi_reduction <minimumf>, %209, %cst_76 [1] : vector<16x6xf32> to vector<16xf32>
      %213 = vector.shape_cast %212 : vector<16xf32> to vector<16x1xf32>
      %214 = arith.cmpf oge, %208, %213 : vector<16x1xf32>
      %215 = arith.extui %214 : vector<16x1xi1> to vector<16x1xi32>
      %216 = arith.sitofp %215 : vector<16x1xi32> to vector<16x1xf32>
      %217 = arith.mulf %216, %208 : vector<16x1xf32>
      %218 = arith.subf %211, %217 : vector<16x1xf32>
      %cst_77 = arith.constant 0.166666672 : f32
      %219 = vector.broadcast %cst_77 : f32 to vector<16x1xf32>
      %220 = arith.mulf %218, %219 : vector<16x1xf32>
      %221 = arith.addf %220, %208 : vector<16x1xf32>
      %cst_78 = arith.constant 6.000000e+00 : f32
      %222 = vector.broadcast %cst_78 : f32 to vector<16x1xf32>
      %223 = arith.subf %222, %216 : vector<16x1xf32>
      %cst_79 = arith.constant 0.166666672 : f32
      %224 = vector.broadcast %cst_79 : f32 to vector<16x1xf32>
      %225 = arith.mulf %223, %224 : vector<16x1xf32>
      %cst_80 = arith.constant 1.000000e+00 : f32
      %226 = vector.broadcast %cst_80 : f32 to vector<16x1xf32>
      %227 = arith.addf %225, %226 : vector<16x1xf32>
      %228 = arith.mulf %227, %207 : vector<16x1xf32>
      %229 = arith.subf %221, %228 : vector<16x1xf32>
      %cst_81 = arith.constant 0.000000e+00 : f32
      %230 = vector.broadcast %cst_81 : f32 to vector<16x1xf32>
      %231 = arith.subf %230, %229 : vector<16x1xf32>
      %c0_82 = arith.constant 0 : index
      %c0_83 = arith.constant 0 : index
      %232 = vector.load %arg5[%c0_82, %c0_83] : memref<16x1xf32, #tpu.memory_space<vmem>>, vector<16x1xf32>
      tpu.vector_store %arg5[%c0_82, %c0_83], %231 {strides = array<i32>} : memref<16x1xf32, #tpu.memory_space<vmem>>, vector<16x1xf32>,
    } else {
    }
    return
  }
  func.func @transform_0(%arg0: i32, %arg1: i32) -> (i32, i32) {
    %c0_i32 = arith.constant 0 : i32
    %c0_i32_0 = arith.constant 0 : i32
    return %arg0, %c0_i32 : i32, i32
  }
  func.func @transform_1(%arg0: i32, %arg1: i32) -> (i32, i32) {
    %c0_i32 = arith.constant 0 : i32
    %c0_i32_0 = arith.constant 0 : i32
    return %arg1, %c0_i32 : i32, i32
  }
  func.func @transform_2(%arg0: i32, %arg1: i32) -> (i32, i32) {
    %c0_i32 = arith.constant 0 : i32
    %c0_i32_0 = arith.constant 0 : i32
    return %arg0, %c0_i32 : i32, i32
  }
  func.func @transform_3(%arg0: i32, %arg1: i32) -> (i32, i32) {
    %c0_i32 = arith.constant 0 : i32
    %c0_i32_0 = arith.constant 0 : i32
    return %arg0, %c0_i32 : i32, i32
  }
}

</mosaic_0001>

<llo_original>
// kernel: tpu_custom_call.1
$region0: #{tpu_custom_call.1}
  #allocation0 [shape = 'u32[]', space=smem, size = 0x4, offset = 0x4, fixed_abs, tag = 'smem constant byte address 0x4 - core index']
  #allocation1 [shape = 'u32[144,128]{1,0:T(1,128)}', space=vmem, size = 0x12000, scoped, tag = 'internal scratch']
  #allocation2 [shape = 'f32[16,1]{1,0:T(8,128)}', space=vmem, size = 0x2000, scoped, tag = 'scratch operand']
  #allocation3 [shape = 'f32[16,1]{1,0:T(8,128)}', space=vmem, size = 0x2000, scoped, tag = 'scratch operand']
  #allocation4 [shape = 'f32[16,1]{1,0:T(8,128)}', space=vmem, size = 0x2000, scoped, tag = 'scratch operand']
  #allocation5 [shape = 'f32[16,6]{1,0:T(8,128)}', space=vmem, size = 0x2000, scoped, tag = 'scratch operand']
  %s0 = inlined_call_operand.vmem [shape: bf16[16,128], index: 0, kind: input, shape index: {}]
  %s1 = inlined_call_operand.hbm [shape: bf16[384,128], index: 1, kind: input, shape index: {}]
  %s2 = inlined_call_operand.vmem [shape: s32[16,1], index: 2, kind: input, shape index: {}]
  %s3 = inlined_call_operand.vmem [shape: f32[16,1], index: 3, kind: output, shape index: {}]
  %s4 = sld [smem:[#allocation0]]
  $region34: #{tpu_custom_call.1} parent=0
    _
  %s6 = ssub.s32 1, %s4
  %s7 = scalar_select 0, %s6, %s4
  $region1: #{tpu_custom_call.1} parent=0
    #allocation6 [shape = 'u8[98304]{0}', space=vmem, size = 0x18000, scoped, tag = 'input window, operand 1, single buffered']
    #allocation7 [shape = 's32[1]{0}', space=sflag, size = 0x4, scoped, tag = 'scoped memory for tpu_custom_call.1']
    %8 = vsyncpa [#allocation7], 0
    // Predicated region
    $region2: #{tpu_custom_call.1} parent=1 // pred_check
      _
    $region3: #{tpu_custom_call.1} parent=1 // pred_check_branch
      %10 = sbr.rel (0) target = $region5
    $region4: #{tpu_custom_call.1} parent=1 // pred_region
      _
    $region5: #{tpu_custom_call.1} parent=1 // pred_fallthru
      _
    // Predicated region
    $region6: #{tpu_custom_call.1} parent=1 // pred_check
      _
    $region7: #{tpu_custom_call.1} parent=1 // pred_check_branch
      %12 = sbr.rel (0) target = $region9
    $region8: #{tpu_custom_call.1} parent=1 // pred_region
      %s14 = ssub.s32 3072, 3072
      %15 = vsyncadd [#allocation7], %s14
      %s16 = sshll.u32 [#allocation6], 4
      %s17 = int_to_ptr.vmem [resolvable:$true] %s16
      %22 = dma.hbm_to_vmem [thread:$0]  %s1, 3072, %s17, [#allocation7], 64, 64, 4
    $region9: #{tpu_custom_call.1} parent=1 // pred_fallthru
      _
    // Predicated region
    $region10: #{tpu_custom_call.1} parent=1 // pred_check
      _
    $region11: #{tpu_custom_call.1} parent=1 // pred_check_branch
      %24 = sbr.rel (0) target = $region13
    $region12: #{tpu_custom_call.1} parent=1 // pred_region
      _
    $region13: #{tpu_custom_call.1} parent=1 // pred_fallthru
      _
    // Predicated region
    $region14: #{tpu_custom_call.1} parent=1 // pred_check
      _
    $region15: #{tpu_custom_call.1} parent=1 // pred_check_branch
      %26 = sbr.rel (0) target = $region17
    $region16: #{tpu_custom_call.1} parent=1 // pred_region
      %27 = dma.done [#allocation7], 3072
    $region17: #{tpu_custom_call.1} parent=1 // pred_fallthru
      _
    %p29 = scmp.eq.s32.totalorder 0, 0
    // Predicated region
    $region18: #{tpu_custom_call.1} parent=1 // pred_check
      %p30 = pneg %p29
    $region19: #{tpu_custom_call.1} parent=1 // pred_check_branch
      %32 = sbr.rel (%p30) target = $region21
    $region20: #{tpu_custom_call.1} parent=1 // pred_region
      %vm33 = vcmask 7168
      %34 = vst.msk [vmem:[#allocation2] sm:$0xff] %vm33, -inf
      %35 = vst.msk [vmem:[#allocation2 + $0x8] sm:$0xff] %vm33, -inf
      %36 = vst.msk [vmem:[#allocation3] sm:$0xff] %vm33, 0.0
      %37 = vst.msk [vmem:[#allocation3 + $0x8] sm:$0xff] %vm33, 0.0
      %38 = vst.msk [vmem:[#allocation4] sm:$0xff] %vm33, 0.0
      %39 = vst.msk [vmem:[#allocation4 + $0x8] sm:$0xff] %vm33, 0.0
      %vm40 = vcmask 48128
      %41 = vst.msk [vmem:[#allocation5] sm:$0xff] %vm40, -inf
      %42 = vst.msk [vmem:[#allocation5 + $0x8] sm:$0xff] %vm40, -inf
    $region21: #{tpu_custom_call.1} parent=1 // pred_fallthru
      _
    %v43 = vld [vmem:[%s0] sm:$0xf]
    %v44 = vld [vmem:[%s0 + $0x4] sm:$0xf]
    %v45 = vld [vmem:[#allocation6] sm:$0xf]
    %v46 = vld [vmem:[#allocation6 + $0x4] sm:$0xf]
    %v47 = vld [vmem:[#allocation6 + $0x8] sm:$0xf]
    %v48 = vld [vmem:[#allocation6 + $0xc] sm:$0xf]
    %v49 = vld [vmem:[#allocation6 + $0x10] sm:$0xf]
    %v50 = vld [vmem:[#allocation6 + $0x14] sm:$0xf]
    %v51 = vld [vmem:[#allocation6 + $0x18] sm:$0xf]
    %v52 = vld [vmem:[#allocation6 + $0x1c] sm:$0xf]
    %v53 = vld [vmem:[#allocation6 + $0x20] sm:$0xf]
    %v54 = vld [vmem:[#allocation6 + $0x24] sm:$0xf]
    %v55 = vld [vmem:[#allocation6 + $0x28] sm:$0xf]
    %v56 = vld [vmem:[#allocation6 + $0x2c] sm:$0xf]
    %v57 = vld [vmem:[#allocation6 + $0x30] sm:$0xf]
    %v58 = vld [vmem:[#allocation6 + $0x34] sm:$0xf]
    %v59 = vld [vmem:[#allocation6 + $0x38] sm:$0xf]
    %v60 = vld [vmem:[#allocation6 + $0x3c] sm:$0xf]
    %v61 = vld [vmem:[#allocation6 + $0x40] sm:$0xf]
    %v62 = vld [vmem:[#allocation6 + $0x44] sm:$0xf]
    %v63 = vld [vmem:[#allocation6 + $0x48] sm:$0xf]
    %v64 = vld [vmem:[#allocation6 + $0x4c] sm:$0xf]
    %v65 = vld [vmem:[#allocation6 + $0x50] sm:$0xf]
    %v66 = vld [vmem:[#allocation6 + $0x54] sm:$0xf]
    %v67 = vld [vmem:[#allocation6 + $0x58] sm:$0xf]
    %v68 = vld [vmem:[#allocation6 + $0x5c] sm:$0xf]
    %v69 = vld [vmem:[#allocation6 + $0x60] sm:$0xf]
    %v70 = vld [vmem:[#allocation6 + $0x64] sm:$0xf]
    %v71 = vld [vmem:[#allocation6 + $0x68] sm:$0xf]
    %v72 = vld [vmem:[#allocation6 + $0x6c] sm:$0xf]
    %v73 = vld [vmem:[#allocation6 + $0x70] sm:$0xf]
    %v74 = vld [vmem:[#allocation6 + $0x74] sm:$0xf]
    %v75 = vld [vmem:[#allocation6 + $0x78] sm:$0xf]
    %v76 = vld [vmem:[#allocation6 + $0x7c] sm:$0xf]
    %v77 = vld [vmem:[#allocation6 + $0x80] sm:$0xf]
    %v78 = vld [vmem:[#allocation6 + $0x84] sm:$0xf]
    %v79 = vld [vmem:[#allocation6 + $0x88] sm:$0xf]
    %v80 = vld [vmem:[#allocation6 + $0x8c] sm:$0xf]
    %v81 = vld [vmem:[#allocation6 + $0x90] sm:$0xf]
    %v82 = vld [vmem:[#allocation6 + $0x94] sm:$0xf]
    %v83 = vld [vmem:[#allocation6 + $0x98] sm:$0xf]
    %v84 = vld [vmem:[#allocation6 + $0x9c] sm:$0xf]
    %v85 = vld [vmem:[#allocation6 + $0xa0] sm:$0xf]
    %v86 = vld [vmem:[#allocation6 + $0xa4] sm:$0xf]
    %v87 = vld [vmem:[#allocation6 + $0xa8] sm:$0xf]
    %v88 = vld [vmem:[#allocation6 + $0xac] sm:$0xf]
    %v89 = vld [vmem:[#allocation6 + $0xb0] sm:$0xf]
    %v90 = vld [vmem:[#allocation6 + $0xb4] sm:$0xf]
    %v91 = vld [vmem:[#allocation6 + $0xb8] sm:$0xf]
    %v92 = vld [vmem:[#allocation6 + $0xbc] sm:$0xf]
    %v95 = vunpack.c.l.b16 %v43
    %v96 = vunpack.c.l.b16 %v44
    %v97 = vpack.c.b16 %v96, %v95
    %v147 = vunpack.c.l.b16 %v45
    %v148 = vunpack.c.l.b16 %v46
    %v149 = vunpack.c.l.b16 %v47
    %v150 = vunpack.c.l.b16 %v48
    %v151 = vunpack.c.l.b16 %v49
    %v152 = vunpack.c.l.b16 %v50
    %v153 = vunpack.c.l.b16 %v51
    %v154 = vunpack.c.l.b16 %v52
    %v155 = vunpack.c.l.b16 %v53
    %v156 = vunpack.c.l.b16 %v54
    %v157 = vunpack.c.l.b16 %v55
    %v158 = vunpack.c.l.b16 %v56
    %v159 = vunpack.c.l.b16 %v57
    %v160 = vunpack.c.l.b16 %v58
    %v161 = vunpack.c.l.b16 %v59
    %v162 = vunpack.c.l.b16 %v60
    %v163 = vunpack.c.l.b16 %v61
    %v164 = vunpack.c.l.b16 %v62
    %v165 = vunpack.c.l.b16 %v63
    %v166 = vunpack.c.l.b16 %v64
    %v167 = vunpack.c.l.b16 %v65
    %v168 = vunpack.c.l.b16 %v66
    %v169 = vunpack.c.l.b16 %v67
    %v170 = vunpack.c.l.b16 %v68
    %v171 = vunpack.c.l.b16 %v69
    %v172 = vunpack.c.l.b16 %v70
    %v173 = vunpack.c.l.b16 %v71
    %v174 = vunpack.c.l.b16 %v72
    %v175 = vunpack.c.l.b16 %v73
    %v176 = vunpack.c.l.b16 %v74
    %v177 = vunpack.c.l.b16 %v75
    %v178 = vunpack.c.l.b16 %v76
    %v179 = vunpack.c.l.b16 %v77
    %v180 = vunpack.c.l.b16 %v78
    %v181 = vunpack.c.l.b16 %v79
    %v182 = vunpack.c.l.b16 %v80
    %v183 = vunpack.c.l.b16 %v81
    %v184 = vunpack.c.l.b16 %v82
    %v185 = vunpack.c.l.b16 %v83
    %v186 = vunpack.c.l.b16 %v84
    %v187 = vunpack.c.l.b16 %v85
    %v188 = vunpack.c.l.b16 %v86
    %v189 = vunpack.c.l.b16 %v87
    %v190 = vunpack.c.l.b16 %v88
    %v191 = vunpack.c.l.b16 %v89
    %v192 = vunpack.c.l.b16 %v90
    %v193 = vunpack.c.l.b16 %v91
    %v194 = vunpack.c.l.b16 %v92
    %v195 = vpack.c.b16 %v148, %v147
    %v196 = vpack.c.b16 %v150, %v149
    %v197 = vpack.c.b16 %v152, %v151
    %v198 = vpack.c.b16 %v154, %v153
    %v199 = vpack.c.b16 %v156, %v155
    %v200 = vpack.c.b16 %v158, %v157
    %v201 = vpack.c.b16 %v160, %v159
    %v202 = vpack.c.b16 %v162, %v161
    %v203 = vpack.c.b16 %v164, %v163
    %v204 = vpack.c.b16 %v166, %v165
    %v205 = vpack.c.b16 %v168, %v167
    %v206 = vpack.c.b16 %v170, %v169
    %v207 = vpack.c.b16 %v172, %v171
    %v208 = vpack.c.b16 %v174, %v173
    %v209 = vpack.c.b16 %v176, %v175
    %v210 = vpack.c.b16 %v178, %v177
    %v211 = vpack.c.b16 %v180, %v179
    %v212 = vpack.c.b16 %v182, %v181
    %v213 = vpack.c.b16 %v184, %v183
    %v214 = vpack.c.b16 %v186, %v185
    %v215 = vpack.c.b16 %v188, %v187
    %v216 = vpack.c.b16 %v190, %v189
    %v217 = vpack.c.b16 %v192, %v191
    %v218 = vpack.c.b16 %v194, %v193
    %243 = vmatprep.subr.bf16.mxu0 0
    %244 = vmatpush1.bf16.xpose.msra.mxu0 %v202
    %245 = vmatprep.subr.bf16.mxu0 0
    %246 = vmatpush1.bf16.xpose.msra.mxu0 %v201
    %247 = vmatprep.subr.bf16.mxu0 0
    %248 = vmatpush1.bf16.xpose.msra.mxu0 %v200
    %249 = vmatprep.subr.bf16.mxu0 0
    %250 = vmatpush1.bf16.xpose.msra.mxu0 %v199
    %251 = vmatprep.subr.bf16.mxu0 0
    %252 = vmatpush1.bf16.xpose.msra.mxu0 %v198
    %253 = vmatprep.subr.bf16.mxu0 0
    %254 = vmatpush1.bf16.xpose.msra.mxu0 %v197
    %255 = vmatprep.subr.bf16.mxu0 0
    %256 = vmatpush1.bf16.xpose.msra.mxu0 %v196
    %257 = vmatprep.subr.bf16.mxu0 0
    %258 = vmatpush1.bf16.xpose.msra.mxu0 %v195
    %259 = vmatprep.subr.bf16.mxu0 0
    %260 = vmatpush2.bf16.xpose.msra.mxu0 %v210
    %261 = vmatprep.subr.bf16.mxu0 0
    %262 = vmatpush2.bf16.xpose.msra.mxu0 %v209
    %263 = vmatprep.subr.bf16.mxu0 0
    %264 = vmatpush2.bf16.xpose.msra.mxu0 %v208
    %265 = vmatprep.subr.bf16.mxu0 0
    %266 = vmatpush2.bf16.xpose.msra.mxu0 %v207
    %267 = vmatprep.subr.bf16.mxu0 0
    %268 = vmatpush2.bf16.xpose.msra.mxu0 %v206
    %269 = vmatprep.subr.bf16.mxu0 0
    %270 = vmatpush2.bf16.xpose.msra.mxu0 %v205
    %271 = vmatprep.subr.bf16.mxu0 0
    %272 = vmatpush2.bf16.xpose.msra.mxu0 %v204
    %273 = vmatprep.subr.bf16.mxu0 0
    %274 = vmatpush2.bf16.xpose.msra.mxu0 %v203
    %275 = vmatprep.mubr.bf16.mxu0 0
    %276 = vmatmul.mubr.bf16.gmra.mxu0 %v97
    %v277 = vpop.f32.mrf.mxu0
    %v278 = vadd.f32 0.0, %v277
    %v279 = vpop.f32.mrf.mxu0
    %v280 = vadd.f32 0.0, %v279
    %v281 = vpop.f32.mrf.mxu0
    %v282 = vadd.f32 0.0, %v281
    %v283 = vpop.f32.mrf.mxu0
    %v284 = vadd.f32 0.0, %v283
    %285 = vdwg.mxu0
    %286 = vmatprep.subr.bf16.mxu0 0
    %287 = vmatpush1.bf16.xpose.msra.mxu0 %v218
    %288 = vmatprep.subr.bf16.mxu0 0
    %289 = vmatpush1.bf16.xpose.msra.mxu0 %v217
    %290 = vmatprep.subr.bf16.mxu0 0
    %291 = vmatpush1.bf16.xpose.msra.mxu0 %v216
    %292 = vmatprep.subr.bf16.mxu0 0
    %293 = vmatpush1.bf16.xpose.msra.mxu0 %v215
    %294 = vmatprep.subr.bf16.mxu0 0
    %295 = vmatpush1.bf16.xpose.msra.mxu0 %v214
    %296 = vmatprep.subr.bf16.mxu0 0
    %297 = vmatpush1.bf16.xpose.msra.mxu0 %v213
    %298 = vmatprep.subr.bf16.mxu0 0
    %299 = vmatpush1.bf16.xpose.msra.mxu0 %v212
    %300 = vmatprep.subr.bf16.mxu0 0
    %301 = vmatpush1.bf16.xpose.msra.mxu0 %v211
    %302 = vmatprep.subr.bf16.mxu0 0
    %303 = vmatpush2.bf16.xpose.msra.mxu0 0
    %304 = vmatprep.subr.bf16.mxu0 0
    %305 = vmatpush2.bf16.xpose.msra.mxu0 0
    %306 = vmatprep.subr.bf16.mxu0 0
    %307 = vmatpush2.bf16.xpose.msra.mxu0 0
    %308 = vmatprep.subr.bf16.mxu0 0
    %309 = vmatpush2.bf16.xpose.msra.mxu0 0
    %310 = vmatprep.subr.bf16.mxu0 0
    %311 = vmatpush2.bf16.xpose.msra.mxu0 0
    %312 = vmatprep.subr.bf16.mxu0 0
    %313 = vmatpush2.bf16.xpose.msra.mxu0 0
    %314 = vmatprep.subr.bf16.mxu0 0
    %315 = vmatpush2.bf16.xpose.msra.mxu0 0
    %316 = vmatprep.subr.bf16.mxu0 0
    %317 = vmatpush2.bf16.xpose.msra.mxu0 0
    %318 = vmatprep.mubr.bf16.mxu0 0
    %319 = vmatmul.mubr.bf16.gmra.mxu0 %v97
    %v320 = vpop.f32.mrf.mxu0
    %v321 = vadd.f32 0.0, %v320
    %v322 = vpop.f32.mrf.mxu0
    %v323 = vpop.f32.mrf.mxu0
    %v324 = vadd.f32 0.0, %v323
    %v325 = vpop.f32.mrf.mxu0
    %326 = vdwg.mxu0
    %v327 = vlaneseq
    %v328 = vand.u32 %v327, 127
    %v329 = vadd.s32 %v328, 128
    %v330 = vadd.s32 %v328, 256
    %s331 = smul.u32 0, 384
    %s332 = ssub.s32 320, %s331
    %v333 = vstv %s332
    %vm334 = vcmp.lt.s32.totalorder %v328, %v333
    %vm335 = vcmp.lt.s32.totalorder %v329, %v333
    %vm336 = vcmp.lt.s32.totalorder %v330, %v333
    %v337 = vsel %vm334, %v278, -inf
    %v338 = vsel %vm335, %v280, -inf
    %v339 = vsel %vm336, %v321, -inf
    %v340 = vsel %vm334, %v282, -inf
    %v341 = vsel %vm335, %v284, -inf
    %v342 = vsel %vm336, %v324, -inf
    %v343 = vld [vmem:[%s2] sm:$0xff]
    %v344 = vld [vmem:[%s2 + $0x8] sm:$0xff]
    %v345 = vstv %s331
    %v346 = vsub.s32 %v343, %v345
    %v347 = vsub.s32 %v344, %v345
    %348 = vset.pattern.permute.xlu0 0
    %349 = vperm.xlu0 %348, %v346
    %v350 = vpop.permute.xlu0 %349
    %351 = vset.pattern.permute.xlu0 0
    %352 = vperm.xlu0 %351, %v347
    %v353 = vpop.permute.xlu0 %352
    %vm354 = vcmp.eq.s32.totalorder %v328, %v350
    %vm355 = vcmp.eq.s32.totalorder %v329, %v350
    %vm356 = vcmp.eq.s32.totalorder %v330, %v350
    %vm357 = vcmp.eq.s32.totalorder %v328, %v353
    %vm358 = vcmp.eq.s32.totalorder %v329, %v353
    %vm359 = vcmp.eq.s32.totalorder %v330, %v353
    %v360 = vld [vmem:[#allocation4] sm:$0xff]
    %v361 = vld [vmem:[#allocation4 + $0x8] sm:$0xff]
    %v362 = vsel %vm354, %v337, 0.0
    %v363 = vsel %vm355, %v338, 0.0
    %v364 = vsel %vm356, %v339, 0.0
    %v365 = vsel %vm357, %v340, 0.0
    %v366 = vsel %vm358, %v341, 0.0
    %v367 = vsel %vm359, %v342, 0.0
    %v368 = vadd.f32 %v362, %v363
    %v369 = vadd.f32 %v368, %v364
    %370 = vadd.xlane.f32.xlu0 %v369
    %v371 = vpop.xlane.xlu0 %370
    %v372 = vadd.f32 %v365, %v366
    %v373 = vadd.f32 %v372, %v367
    %374 = vadd.xlane.f32.xlu0 %v373
    %v375 = vpop.xlane.xlu0 %374
    %v376 = vadd.f32 %v360, %v371
    %v377 = vadd.f32 %v361, %v375
    %vm378 = vcmask 7168
    %379 = vst.msk [vmem:[#allocation4] sm:$0xff] %vm378, %v376
    %380 = vst.msk [vmem:[#allocation4 + $0x8] sm:$0xff] %vm378, %v377
    %v381 = vmax.f32 %v337, %v339
    %v382 = vmax.f32 %v381, %v338
    %383 = vmax.xlane.f32.xlu0 %v382
    %v384 = vpop.xlane.xlu0 %383
    %v385 = vmax.f32 %v340, %v342
    %v386 = vmax.f32 %v385, %v341
    %387 = vmax.xlane.f32.xlu0 %v386
    %v388 = vpop.xlane.xlu0 %387
    %v389 = vld [vmem:[#allocation2] sm:$0xff]
    %v390 = vld [vmem:[#allocation2 + $0x8] sm:$0xff]
    %v391 = vmax.f32 %v389, %v384
    %v392 = vmax.f32 %v390, %v388
    %v393 = vld [vmem:[#allocation3] sm:$0xff]
    %v394 = vld [vmem:[#allocation3 + $0x8] sm:$0xff]
    %v395 = vsub.f32 %v389, %v391
    %v396 = vsub.f32 %v390, %v392
    %v397 = vmul.f32 %v395, 1.442695
    %v398 = vpow.pop %v397
    %v399 = vmul.f32 %v396, 1.442695
    %v400 = vpow.pop %v399
    %v401 = vmul.f32 %v393, %v398
    %v402 = vmul.f32 %v394, %v400
    %404 = vset.pattern.permute.xlu0 0
    %405 = vperm.xlu0 %404, %v391
    %v406 = vpop.permute.xlu0 %405
    %409 = vset.pattern.permute.xlu0 0
    %410 = vperm.xlu0 %409, %v392
    %v411 = vpop.permute.xlu0 %410
    %v413 = vsub.f32 %v337, %v406
    %v414 = vsub.f32 %v338, %v406
    %v415 = vsub.f32 %v339, %v406
    %v416 = vsub.f32 %v340, %v411
    %v417 = vsub.f32 %v341, %v411
    %v418 = vsub.f32 %v342, %v411
    %v419 = vmul.f32 %v413, 1.442695
    %v420 = vpow.pop %v419
    %v421 = vmul.f32 %v414, 1.442695
    %v422 = vpow.pop %v421
    %v423 = vmul.f32 %v415, 1.442695
    %v424 = vpow.pop %v423
    %v425 = vmul.f32 %v416, 1.442695
    %v426 = vpow.pop %v425
    %v427 = vmul.f32 %v417, 1.442695
    %v428 = vpow.pop %v427
    %v429 = vmul.f32 %v418, 1.442695
    %v430 = vpow.pop %v429
    %v431 = vadd.f32 %v420, %v422
    %v432 = vadd.f32 %v431, %v424
    %433 = vadd.xlane.f32.xlu0 %v432
    %v434 = vpop.xlane.xlu0 %433
    %v435 = vadd.f32 %v426, %v428
    %v436 = vadd.f32 %v435, %v430
    %437 = vadd.xlane.f32.xlu0 %v436
    %v438 = vpop.xlane.xlu0 %437
    %v439 = vadd.f32 %v401, %v434
    %v440 = vadd.f32 %v402, %v438
    %441 = vst.msk [vmem:[#allocation3] sm:$0xff] %vm378, %v439
    %442 = vst.msk [vmem:[#allocation3 + $0x8] sm:$0xff] %vm378, %v440
    %443 = vst.msk [vmem:[#allocation2] sm:$0xff] %vm378, %v391
    %444 = vst.msk [vmem:[#allocation2 + $0x8] sm:$0xff] %vm378, %v392
    %v445 = vld [vmem:[#allocation5] sm:$0xff]
    %v446 = vld [vmem:[#allocation5 + $0x8] sm:$0xff]
    %vm447 = vcmp.eq.f32.partialorder %v337, %v384
    %vm448 = vcmp.eq.f32.partialorder %v338, %v384
    %vm449 = vcmp.eq.f32.partialorder %v339, %v384
    %vm450 = vcmp.eq.f32.partialorder %v340, %v388
    %vm451 = vcmp.eq.f32.partialorder %v341, %v388
    %vm452 = vcmp.eq.f32.partialorder %v342, %v388
    %v453 = vsel %vm447, %v328, 384
    %v454 = vsel %vm448, %v329, 384
    %v455 = vsel %vm449, %v330, 384
    %v456 = vsel %vm450, %v328, 384
    %v457 = vsel %vm451, %v329, 384
    %v458 = vsel %vm452, %v330, 384
    %vm459 = vcmp.lt.s32.totalorder %v453, %v455
    %v460 = vsel %vm459, %v453, %v455
    %vm461 = vcmp.lt.s32.totalorder %v460, %v454
    %v462 = vsel %vm461, %v460, %v454
    %v463 = vand.u32 %v462, 65535
    %v464 = vshra.s32 %v462, 16
    %v465 = vcvt.s32.f32 %v463
    %v466 = vcvt.s32.f32 %v464
    %467 = vmin.xlane.f32.xlu0 %v466
    %v468 = vpop.xlane.xlu0 %467
    %vm469 = vcmp.eq.f32.partialorder %v466, %v468
    %v470 = vsel %vm469, %v465, inf
    %471 = vmin.xlane.f32.xlu0 %v470
    %v472 = vpop.xlane.xlu0 %471
    %v473 = vcvt.f32.s32 %v472
    %v474 = vcvt.f32.s32 %v468
    %v475 = vshll.u32 %v474, 16
    %v476 = vadd.s32 %v475, %v473
    %vm477 = vcmp.lt.s32.totalorder %v456, %v458
    %v478 = vsel %vm477, %v456, %v458
    %vm479 = vcmp.lt.s32.totalorder %v478, %v457
    %v480 = vsel %vm479, %v478, %v457
    %v481 = vand.u32 %v480, 65535
    %v482 = vshra.s32 %v480, 16
    %v483 = vcvt.s32.f32 %v481
    %v484 = vcvt.s32.f32 %v482
    %485 = vmin.xlane.f32.xlu0 %v484
    %v486 = vpop.xlane.xlu0 %485
    %vm487 = vcmp.eq.f32.partialorder %v484, %v486
    %v488 = vsel %vm487, %v483, inf
    %489 = vmin.xlane.f32.xlu0 %v488
    %v490 = vpop.xlane.xlu0 %489
    %v491 = vcvt.f32.s32 %v490
    %v492 = vcvt.f32.s32 %v486
    %v493 = vshll.u32 %v492, 16
    %v494 = vadd.s32 %v493, %v491
    %vm495 = vcmp.eq.s32.totalorder %v328, %v476
    %vm496 = vcmp.eq.s32.totalorder %v329, %v476
    %vm497 = vcmp.eq.s32.totalorder %v330, %v476
    %vm498 = vcmp.eq.s32.totalorder %v328, %v494
    %vm499 = vcmp.eq.s32.totalorder %v329, %v494
    %vm500 = vcmp.eq.s32.totalorder %v330, %v494
    %v501 = vsel %vm495, -inf, %v337
    %v502 = vsel %vm496, -inf, %v338
    %v503 = vsel %vm497, -inf, %v339
    %v504 = vsel %vm498, -inf, %v340
    %v505 = vsel %vm499, -inf, %v341
    %v506 = vsel %vm500, -inf, %v342
    %vm507 = vcmask 48128
    %v508 = vsel %vm507, %v445, inf
    %509 = vmin.xlane.f32.xlu0 %v508
    %v510 = vpop.xlane.xlu0 %509
    %v511 = vsel %vm507, %v446, inf
    %512 = vmin.xlane.f32.xlu0 %v511
    %v513 = vpop.xlane.xlu0 %512
    %vm514 = vcmp.eq.f32.partialorder %v445, %v510
    %vm515 = vcmp.eq.f32.partialorder %v446, %v513
    %v516 = vsel %vm514, %v328, 6
    %v517 = vsel %vm515, %v328, 6
    %v518 = vsel %vm507, %v516, 2147483647
    %v519 = vand.u32 %v518, 65535
    %v520 = vshra.s32 %v518, 16
    %v521 = vcvt.s32.f32 %v519
    %v522 = vcvt.s32.f32 %v520
    %523 = vmin.xlane.f32.xlu0 %v522
    %v524 = vpop.xlane.xlu0 %523
    %vm525 = vcmp.eq.f32.partialorder %v522, %v524
    %v526 = vsel %vm525, %v521, inf
    %527 = vmin.xlane.f32.xlu0 %v526
    %v528 = vpop.xlane.xlu0 %527
    %v529 = vcvt.f32.s32 %v528
    %v530 = vcvt.f32.s32 %v524
    %v531 = vshll.u32 %v530, 16
    %v532 = vadd.s32 %v531, %v529
    %v533 = vsel %vm507, %v517, 2147483647
    %v534 = vand.u32 %v533, 65535
    %v535 = vshra.s32 %v533, 16
    %v536 = vcvt.s32.f32 %v534
    %v537 = vcvt.s32.f32 %v535
    %538 = vmin.xlane.f32.xlu0 %v537
    %v539 = vpop.xlane.xlu0 %538
    %vm540 = vcmp.eq.f32.partialorder %v537, %v539
    %v541 = vsel %vm540, %v536, inf
    %542 = vmin.xlane.f32.xlu0 %v541
    %v543 = vpop.xlane.xlu0 %542
    %v544 = vcvt.f32.s32 %v543
    %v545 = vcvt.f32.s32 %v539
    %v546 = vshll.u32 %v545, 16
    %v547 = vadd.s32 %v546, %v544
    %vm548 = vcmp.gt.f32.partialorder %v384, %v510
    %vm549 = vcmp.gt.f32.partialorder %v388, %v513
    %vm550 = vcmp.eq.s32.totalorder %v328, %v532
    %vm551 = vcmp.eq.s32.totalorder %v328, %v547
    %v552 = vsel %vm548, 1, 0
    %v553 = vsel %vm549, 1, 0
    %vm554 = vcmp.eq.s32.totalorder %v552, 1
    %vm555 = vcmp.eq.s32.totalorder %v553, 1
    %vm556 = vmand %vm554, %vm550
    %vm557 = vmand %vm555, %vm551
    %v558 = vsel %vm556, %v384, %v445
    %v559 = vsel %vm557, %v388, %v446
    %v560 = vmax.f32 %v501, %v503
    %v561 = vmax.f32 %v560, %v502
    %562 = vmax.xlane.f32.xlu0 %v561
    %v563 = vpop.xlane.xlu0 %562
    %v564 = vmax.f32 %v504, %v506
    %v565 = vmax.f32 %v564, %v505
    %566 = vmax.xlane.f32.xlu0 %v565
    %v567 = vpop.xlane.xlu0 %566
    %vm568 = vcmp.eq.f32.partialorder %v501, %v563
    %vm569 = vcmp.eq.f32.partialorder %v502, %v563
    %vm570 = vcmp.eq.f32.partialorder %v503, %v563
    %vm571 = vcmp.eq.f32.partialorder %v504, %v567
    %vm572 = vcmp.eq.f32.partialorder %v505, %v567
    %vm573 = vcmp.eq.f32.partialorder %v506, %v567
    %v574 = vsel %vm568, %v328, 384
    %v575 = vsel %vm569, %v329, 384
    %v576 = vsel %vm570, %v330, 384
    %v577 = vsel %vm571, %v328, 384
    %v578 = vsel %vm572, %v329, 384
    %v579 = vsel %vm573, %v330, 384
    %vm580 = vcmp.lt.s32.totalorder %v574, %v576
    %v581 = vsel %vm580, %v574, %v576
    %vm582 = vcmp.lt.s32.totalorder %v581, %v575
    %v583 = vsel %vm582, %v581, %v575
    %v584 = vand.u32 %v583, 65535
    %v585 = vshra.s32 %v583, 16
    %v586 = vcvt.s32.f32 %v584
    %v587 = vcvt.s32.f32 %v585
    %588 = vmin.xlane.f32.xlu0 %v587
    %v589 = vpop.xlane.xlu0 %588
    %vm590 = vcmp.eq.f32.partialorder %v587, %v589
    %v591 = vsel %vm590, %v586, inf
    %592 = vmin.xlane.f32.xlu0 %v591
    %v593 = vpop.xlane.xlu0 %592
    %v594 = vcvt.f32.s32 %v593
    %v595 = vcvt.f32.s32 %v589
    %v596 = vshll.u32 %v595, 16
    %v597 = vadd.s32 %v596, %v594
    %vm598 = vcmp.lt.s32.totalorder %v577, %v579
    %v599 = vsel %vm598, %v577, %v579
    %vm600 = vcmp.lt.s32.totalorder %v599, %v578
    %v601 = vsel %vm600, %v599, %v578
    %v602 = vand.u32 %v601, 65535
    %v603 = vshra.s32 %v601, 16
    %v604 = vcvt.s32.f32 %v602
    %v605 = vcvt.s32.f32 %v603
    %606 = vmin.xlane.f32.xlu0 %v605
    %v607 = vpop.xlane.xlu0 %606
    %vm608 = vcmp.eq.f32.partialorder %v605, %v607
    %v609 = vsel %vm608, %v604, inf
    %610 = vmin.xlane.f32.xlu0 %v609
    %v611 = vpop.xlane.xlu0 %610
    %v612 = vcvt.f32.s32 %v611
    %v613 = vcvt.f32.s32 %v607
    %v614 = vshll.u32 %v613, 16
    %v615 = vadd.s32 %v614, %v612
    %vm616 = vcmp.eq.s32.totalorder %v328, %v597
    %vm617 = vcmp.eq.s32.totalorder %v329, %v597
    %vm618 = vcmp.eq.s32.totalorder %v330, %v597
    %vm619 = vcmp.eq.s32.totalorder %v328, %v615
    %vm620 = vcmp.eq.s32.totalorder %v329, %v615
    %vm621 = vcmp.eq.s32.totalorder %v330, %v615
    %v622 = vsel %vm616, -inf, %v501
    %v623 = vsel %vm617, -inf, %v502
    %v624 = vsel %vm618, -inf, %v503
    %v625 = vsel %vm619, -inf, %v504
    %v626 = vsel %vm620, -inf, %v505
    %v627 = vsel %vm621, -inf, %v506
    %v628 = vsel %vm507, %v558, inf
    %629 = vmin.xlane.f32.xlu0 %v628
    %v630 = vpop.xlane.xlu0 %629
    %v631 = vsel %vm507, %v559, inf
    %632 = vmin.xlane.f32.xlu0 %v631
    %v633 = vpop.xlane.xlu0 %632
    %vm634 = vcmp.eq.f32.partialorder %v558, %v630
    %vm635 = vcmp.eq.f32.partialorder %v559, %v633
    %v636 = vsel %vm634, %v328, 6
    %v637 = vsel %vm635, %v328, 6
    %v638 = vsel %vm507, %v636, 2147483647
    %v639 = vand.u32 %v638, 65535
    %v640 = vshra.s32 %v638, 16
    %v641 = vcvt.s32.f32 %v639
    %v642 = vcvt.s32.f32 %v640
    %643 = vmin.xlane.f32.xlu0 %v642
    %v644 = vpop.xlane.xlu0 %643
    %vm645 = vcmp.eq.f32.partialorder %v642, %v644
    %v646 = vsel %vm645, %v641, inf
    %647 = vmin.xlane.f32.xlu0 %v646
    %v648 = vpop.xlane.xlu0 %647
    %v649 = vcvt.f32.s32 %v648
    %v650 = vcvt.f32.s32 %v644
    %v651 = vshll.u32 %v650, 16
    %v652 = vadd.s32 %v651, %v649
    %v653 = vsel %vm507, %v637, 2147483647
    %v654 = vand.u32 %v653, 65535
    %v655 = vshra.s32 %v653, 16
    %v656 = vcvt.s32.f32 %v654
    %v657 = vcvt.s32.f32 %v655
    %658 = vmin.xlane.f32.xlu0 %v657
    %v659 = vpop.xlane.xlu0 %658
    %vm660 = vcmp.eq.f32.partialorder %v657, %v659
    %v661 = vsel %vm660, %v656, inf
    %662 = vmin.xlane.f32.xlu0 %v661
    %v663 = vpop.xlane.xlu0 %662
    %v664 = vcvt.f32.s32 %v663
    %v665 = vcvt.f32.s32 %v659
    %v666 = vshll.u32 %v665, 16
    %v667 = vadd.s32 %v666, %v664
    %vm668 = vcmp.gt.f32.partialorder %v563, %v630
    %vm669 = vcmp.gt.f32.partialorder %v567, %v633
    %vm670 = vcmp.eq.s32.totalorder %v328, %v652
    %vm671 = vcmp.eq.s32.totalorder %v328, %v667
    %v672 = vsel %vm668, 1, 0
    %v673 = vsel %vm669, 1, 0
    %vm674 = vcmp.eq.s32.totalorder %v672, 1
    %vm675 = vcmp.eq.s32.totalorder %v673, 1
    %vm676 = vmand %vm674, %vm670
    %vm677 = vmand %vm675, %vm671
    %v678 = vsel %vm676, %v563, %v558
    %v679 = vsel %vm677, %v567, %v559
    %v680 = vmax.f32 %v622, %v624
    %v681 = vmax.f32 %v680, %v623
    %682 = vmax.xlane.f32.xlu0 %v681
    %v683 = vpop.xlane.xlu0 %682
    %v684 = vmax.f32 %v625, %v627
    %v685 = vmax.f32 %v684, %v626
    %686 = vmax.xlane.f32.xlu0 %v685
    %v687 = vpop.xlane.xlu0 %686
    %vm688 = vcmp.eq.f32.partialorder %v622, %v683
    %vm689 = vcmp.eq.f32.partialorder %v623, %v683
    %vm690 = vcmp.eq.f32.partialorder %v624, %v683
    %vm691 = vcmp.eq.f32.partialorder %v625, %v687
    %vm692 = vcmp.eq.f32.partialorder %v626, %v687
    %vm693 = vcmp.eq.f32.partialorder %v627, %v687
    %v694 = vsel %vm688, %v328, 384
    %v695 = vsel %vm689, %v329, 384
    %v696 = vsel %vm690, %v330, 384
    %v697 = vsel %vm691, %v328, 384
    %v698 = vsel %vm692, %v329, 384
    %v699 = vsel %vm693, %v330, 384
    %vm700 = vcmp.lt.s32.totalorder %v694, %v696
    %v701 = vsel %vm700, %v694, %v696
    %vm702 = vcmp.lt.s32.totalorder %v701, %v695
    %v703 = vsel %vm702, %v701, %v695
    %v704 = vand.u32 %v703, 65535
    %v705 = vshra.s32 %v703, 16
    %v706 = vcvt.s32.f32 %v704
    %v707 = vcvt.s32.f32 %v705
    %708 = vmin.xlane.f32.xlu0 %v707
    %v709 = vpop.xlane.xlu0 %708
    %vm710 = vcmp.eq.f32.partialorder %v707, %v709
    %v711 = vsel %vm710, %v706, inf
    %712 = vmin.xlane.f32.xlu0 %v711
    %v713 = vpop.xlane.xlu0 %712
    %v714 = vcvt.f32.s32 %v713
    %v715 = vcvt.f32.s32 %v709
    %v716 = vshll.u32 %v715, 16
    %v717 = vadd.s32 %v716, %v714
    %vm718 = vcmp.lt.s32.totalorder %v697, %v699
    %v719 = vsel %vm718, %v697, %v699
    %vm720 = vcmp.lt.s32.totalorder %v719, %v698
    %v721 = vsel %vm720, %v719, %v698
    %v722 = vand.u32 %v721, 65535
    %v723 = vshra.s32 %v721, 16
    %v724 = vcvt.s32.f32 %v722
    %v725 = vcvt.s32.f32 %v723
    %726 = vmin.xlane.f32.xlu0 %v725
    %v727 = vpop.xlane.xlu0 %726
    %vm728 = vcmp.eq.f32.partialorder %v725, %v727
    %v729 = vsel %vm728, %v724, inf
    %730 = vmin.xlane.f32.xlu0 %v729
    %v731 = vpop.xlane.xlu0 %730
    %v732 = vcvt.f32.s32 %v731
    %v733 = vcvt.f32.s32 %v727
    %v734 = vshll.u32 %v733, 16
    %v735 = vadd.s32 %v734, %v732
    %vm736 = vcmp.eq.s32.totalorder %v328, %v717
    %vm737 = vcmp.eq.s32.totalorder %v329, %v717
    %vm738 = vcmp.eq.s32.totalorder %v330, %v717
    %vm739 = vcmp.eq.s32.totalorder %v328, %v735
    %vm740 = vcmp.eq.s32.totalorder %v329, %v735
    %vm741 = vcmp.eq.s32.totalorder %v330, %v735
    %v742 = vsel %vm736, -inf, %v622
    %v743 = vsel %vm737, -inf, %v623
    %v744 = vsel %vm738, -inf, %v624
    %v745 = vsel %vm739, -inf, %v625
    %v746 = vsel %vm740, -inf, %v626
    %v747 = vsel %vm741, -inf, %v627
    %v748 = vsel %vm507, %v678, inf
    %749 = vmin.xlane.f32.xlu0 %v748
    %v750 = vpop.xlane.xlu0 %749
    %v751 = vsel %vm507, %v679, inf
    %752 = vmin.xlane.f32.xlu0 %v751
    %v753 = vpop.xlane.xlu0 %752
    %vm754 = vcmp.eq.f32.partialorder %v678, %v750
    %vm755 = vcmp.eq.f32.partialorder %v679, %v753
    %v756 = vsel %vm754, %v328, 6
    %v757 = vsel %vm755, %v328, 6
    %v758 = vsel %vm507, %v756, 2147483647
    %v759 = vand.u32 %v758, 65535
    %v760 = vshra.s32 %v758, 16
    %v761 = vcvt.s32.f32 %v759
    %v762 = vcvt.s32.f32 %v760
    %763 = vmin.xlane.f32.xlu0 %v762
    %v764 = vpop.xlane.xlu0 %763
    %vm765 = vcmp.eq.f32.partialorder %v762, %v764
    %v766 = vsel %vm765, %v761, inf
    %767 = vmin.xlane.f32.xlu0 %v766
    %v768 = vpop.xlane.xlu0 %767
    %v769 = vcvt.f32.s32 %v768
    %v770 = vcvt.f32.s32 %v764
    %v771 = vshll.u32 %v770, 16
    %v772 = vadd.s32 %v771, %v769
    %v773 = vsel %vm507, %v757, 2147483647
    %v774 = vand.u32 %v773, 65535
    %v775 = vshra.s32 %v773, 16
    %v776 = vcvt.s32.f32 %v774
    %v777 = vcvt.s32.f32 %v775
    %778 = vmin.xlane.f32.xlu0 %v777
    %v779 = vpop.xlane.xlu0 %778
    %vm780 = vcmp.eq.f32.partialorder %v777, %v779
    %v781 = vsel %vm780, %v776, inf
    %782 = vmin.xlane.f32.xlu0 %v781
    %v783 = vpop.xlane.xlu0 %782
    %v784 = vcvt.f32.s32 %v783
    %v785 = vcvt.f32.s32 %v779
    %v786 = vshll.u32 %v785, 16
    %v787 = vadd.s32 %v786, %v784
    %vm788 = vcmp.gt.f32.partialorder %v683, %v750
    %vm789 = vcmp.gt.f32.partialorder %v687, %v753
    %vm790 = vcmp.eq.s32.totalorder %v328, %v772
    %vm791 = vcmp.eq.s32.totalorder %v328, %v787
    %v792 = vsel %vm788, 1, 0
    %v793 = vsel %vm789, 1, 0
    %vm794 = vcmp.eq.s32.totalorder %v792, 1
    %vm795 = vcmp.eq.s32.totalorder %v793, 1
    %vm796 = vmand %vm794, %vm790
    %vm797 = vmand %vm795, %vm791
    %v798 = vsel %vm796, %v683, %v678
    %v799 = vsel %vm797, %v687, %v679
    %v800 = vmax.f32 %v742, %v744
    %v801 = vmax.f32 %v800, %v743
    %802 = vmax.xlane.f32.xlu0 %v801
    %v803 = vpop.xlane.xlu0 %802
    %v804 = vmax.f32 %v745, %v747
    %v805 = vmax.f32 %v804, %v746
    %806 = vmax.xlane.f32.xlu0 %v805
    %v807 = vpop.xlane.xlu0 %806
    %vm808 = vcmp.eq.f32.partialorder %v742, %v803
    %vm809 = vcmp.eq.f32.partialorder %v743, %v803
    %vm810 = vcmp.eq.f32.partialorder %v744, %v803
    %vm811 = vcmp.eq.f32.partialorder %v745, %v807
    %vm812 = vcmp.eq.f32.partialorder %v746, %v807
    %vm813 = vcmp.eq.f32.partialorder %v747, %v807
    %v814 = vsel %vm808, %v328, 384
    %v815 = vsel %vm809, %v329, 384
    %v816 = vsel %vm810, %v330, 384
    %v817 = vsel %vm811, %v328, 384
    %v818 = vsel %vm812, %v329, 384
    %v819 = vsel %vm813, %v330, 384
    %vm820 = vcmp.lt.s32.totalorder %v814, %v816
    %v821 = vsel %vm820, %v814, %v816
    %vm822 = vcmp.lt.s32.totalorder %v821, %v815
    %v823 = vsel %vm822, %v821, %v815
    %v824 = vand.u32 %v823, 65535
    %v825 = vshra.s32 %v823, 16
    %v826 = vcvt.s32.f32 %v824
    %v827 = vcvt.s32.f32 %v825
    %828 = vmin.xlane.f32.xlu0 %v827
    %v829 = vpop.xlane.xlu0 %828
    %vm830 = vcmp.eq.f32.partialorder %v827, %v829
    %v831 = vsel %vm830, %v826, inf
    %832 = vmin.xlane.f32.xlu0 %v831
    %v833 = vpop.xlane.xlu0 %832
    %v834 = vcvt.f32.s32 %v833
    %v835 = vcvt.f32.s32 %v829
    %v836 = vshll.u32 %v835, 16
    %v837 = vadd.s32 %v836, %v834
    %vm838 = vcmp.lt.s32.totalorder %v817, %v819
    %v839 = vsel %vm838, %v817, %v819
    %vm840 = vcmp.lt.s32.totalorder %v839, %v818
    %v841 = vsel %vm840, %v839, %v818
    %v842 = vand.u32 %v841, 65535
    %v843 = vshra.s32 %v841, 16
    %v844 = vcvt.s32.f32 %v842
    %v845 = vcvt.s32.f32 %v843
    %846 = vmin.xlane.f32.xlu0 %v845
    %v847 = vpop.xlane.xlu0 %846
    %vm848 = vcmp.eq.f32.partialorder %v845, %v847
    %v849 = vsel %vm848, %v844, inf
    %850 = vmin.xlane.f32.xlu0 %v849
    %v851 = vpop.xlane.xlu0 %850
    %v852 = vcvt.f32.s32 %v851
    %v853 = vcvt.f32.s32 %v847
    %v854 = vshll.u32 %v853, 16
    %v855 = vadd.s32 %v854, %v852
    %vm856 = vcmp.eq.s32.totalorder %v328, %v837
    %vm857 = vcmp.eq.s32.totalorder %v329, %v837
    %vm858 = vcmp.eq.s32.totalorder %v330, %v837
    %vm859 = vcmp.eq.s32.totalorder %v328, %v855
    %vm860 = vcmp.eq.s32.totalorder %v329, %v855
    %vm861 = vcmp.eq.s32.totalorder %v330, %v855
    %v862 = vsel %vm856, -inf, %v742
    %v863 = vsel %vm857, -inf, %v743
    %v864 = vsel %vm858, -inf, %v744
    %v865 = vsel %vm859, -inf, %v745
    %v866 = vsel %vm860, -inf, %v746
    %v867 = vsel %vm861, -inf, %v747
    %v868 = vsel %vm507, %v798, inf
    %869 = vmin.xlane.f32.xlu0 %v868
    %v870 = vpop.xlane.xlu0 %869
    %v871 = vsel %vm507, %v799, inf
    %872 = vmin.xlane.f32.xlu0 %v871
    %v873 = vpop.xlane.xlu0 %872
    %vm874 = vcmp.eq.f32.partialorder %v798, %v870
    %vm875 = vcmp.eq.f32.partialorder %v799, %v873
    %v876 = vsel %vm874, %v328, 6
    %v877 = vsel %vm875, %v328, 6
    %v878 = vsel %vm507, %v876, 2147483647
    %v879 = vand.u32 %v878, 65535
    %v880 = vshra.s32 %v878, 16
    %v881 = vcvt.s32.f32 %v879
    %v882 = vcvt.s32.f32 %v880
    %883 = vmin.xlane.f32.xlu0 %v882
    %v884 = vpop.xlane.xlu0 %883
    %vm885 = vcmp.eq.f32.partialorder %v882, %v884
    %v886 = vsel %vm885, %v881, inf
    %887 = vmin.xlane.f32.xlu0 %v886
    %v888 = vpop.xlane.xlu0 %887
    %v889 = vcvt.f32.s32 %v888
    %v890 = vcvt.f32.s32 %v884
    %v891 = vshll.u32 %v890, 16
    %v892 = vadd.s32 %v891, %v889
    %v893 = vsel %vm507, %v877, 2147483647
    %v894 = vand.u32 %v893, 65535
    %v895 = vshra.s32 %v893, 16
    %v896 = vcvt.s32.f32 %v894
    %v897 = vcvt.s32.f32 %v895
    %898 = vmin.xlane.f32.xlu0 %v897
    %v899 = vpop.xlane.xlu0 %898
    %vm900 = vcmp.eq.f32.partialorder %v897, %v899
    %v901 = vsel %vm900, %v896, inf
    %902 = vmin.xlane.f32.xlu0 %v901
    %v903 = vpop.xlane.xlu0 %902
    %v904 = vcvt.f32.s32 %v903
    %v905 = vcvt.f32.s32 %v899
    %v906 = vshll.u32 %v905, 16
    %v907 = vadd.s32 %v906, %v904
    %vm908 = vcmp.gt.f32.partialorder %v803, %v870
    %vm909 = vcmp.gt.f32.partialorder %v807, %v873
    %vm910 = vcmp.eq.s32.totalorder %v328, %v892
    %vm911 = vcmp.eq.s32.totalorder %v328, %v907
    %v912 = vsel %vm908, 1, 0
    %v913 = vsel %vm909, 1, 0
    %vm914 = vcmp.eq.s32.totalorder %v912, 1
    %vm915 = vcmp.eq.s32.totalorder %v913, 1
    %vm916 = vmand %vm914, %vm910
    %vm917 = vmand %vm915, %vm911
    %v918 = vsel %vm916, %v803, %v798
    %v919 = vsel %vm917, %v807, %v799
    %v920 = vmax.f32 %v862, %v864
    %v921 = vmax.f32 %v920, %v863
    %922 = vmax.xlane.f32.xlu0 %v921
    %v923 = vpop.xlane.xlu0 %922
    %v924 = vmax.f32 %v865, %v867
    %v925 = vmax.f32 %v924, %v866
    %926 = vmax.xlane.f32.xlu0 %v925
    %v927 = vpop.xlane.xlu0 %926
    %vm928 = vcmp.eq.f32.partialorder %v862, %v923
    %vm929 = vcmp.eq.f32.partialorder %v863, %v923
    %vm930 = vcmp.eq.f32.partialorder %v864, %v923
    %vm931 = vcmp.eq.f32.partialorder %v865, %v927
    %vm932 = vcmp.eq.f32.partialorder %v866, %v927
    %vm933 = vcmp.eq.f32.partialorder %v867, %v927
    %v934 = vsel %vm928, %v328, 384
    %v935 = vsel %vm929, %v329, 384
    %v936 = vsel %vm930, %v330, 384
    %v937 = vsel %vm931, %v328, 384
    %v938 = vsel %vm932, %v329, 384
    %v939 = vsel %vm933, %v330, 384
    %vm940 = vcmp.lt.s32.totalorder %v934, %v936
    %v941 = vsel %vm940, %v934, %v936
    %vm942 = vcmp.lt.s32.totalorder %v941, %v935
    %v943 = vsel %vm942, %v941, %v935
    %v944 = vand.u32 %v943, 65535
    %v945 = vshra.s32 %v943, 16
    %v946 = vcvt.s32.f32 %v944
    %v947 = vcvt.s32.f32 %v945
    %948 = vmin.xlane.f32.xlu0 %v947
    %v949 = vpop.xlane.xlu0 %948
    %vm950 = vcmp.eq.f32.partialorder %v947, %v949
    %v951 = vsel %vm950, %v946, inf
    %952 = vmin.xlane.f32.xlu0 %v951
    %v953 = vpop.xlane.xlu0 %952
    %v954 = vcvt.f32.s32 %v953
    %v955 = vcvt.f32.s32 %v949
    %v956 = vshll.u32 %v955, 16
    %v957 = vadd.s32 %v956, %v954
    %vm958 = vcmp.lt.s32.totalorder %v937, %v939
    %v959 = vsel %vm958, %v937, %v939
    %vm960 = vcmp.lt.s32.totalorder %v959, %v938
    %v961 = vsel %vm960, %v959, %v938
    %v962 = vand.u32 %v961, 65535
    %v963 = vshra.s32 %v961, 16
    %v964 = vcvt.s32.f32 %v962
    %v965 = vcvt.s32.f32 %v963
    %966 = vmin.xlane.f32.xlu0 %v965
    %v967 = vpop.xlane.xlu0 %966
    %vm968 = vcmp.eq.f32.partialorder %v965, %v967
    %v969 = vsel %vm968, %v964, inf
    %970 = vmin.xlane.f32.xlu0 %v969
    %v971 = vpop.xlane.xlu0 %970
    %v972 = vcvt.f32.s32 %v971
    %v973 = vcvt.f32.s32 %v967
    %v974 = vshll.u32 %v973, 16
    %v975 = vadd.s32 %v974, %v972
    %vm976 = vcmp.eq.s32.totalorder %v328, %v957
    %vm977 = vcmp.eq.s32.totalorder %v329, %v957
    %vm978 = vcmp.eq.s32.totalorder %v330, %v957
    %vm979 = vcmp.eq.s32.totalorder %v328, %v975
    %vm980 = vcmp.eq.s32.totalorder %v329, %v975
    %vm981 = vcmp.eq.s32.totalorder %v330, %v975
    %v982 = vsel %vm976, -inf, %v862
    %v983 = vsel %vm977, -inf, %v863
    %v984 = vsel %vm978, -inf, %v864
    %v985 = vsel %vm979, -inf, %v865
    %v986 = vsel %vm980, -inf, %v866
    %v987 = vsel %vm981, -inf, %v867
    %v988 = vsel %vm507, %v918, inf
    %989 = vmin.xlane.f32.xlu0 %v988
    %v990 = vpop.xlane.xlu0 %989
    %v991 = vsel %vm507, %v919, inf
    %992 = vmin.xlane.f32.xlu0 %v991
    %v993 = vpop.xlane.xlu0 %992
    %vm994 = vcmp.eq.f32.partialorder %v918, %v990
    %vm995 = vcmp.eq.f32.partialorder %v919, %v993
    %v996 = vsel %vm994, %v328, 6
    %v997 = vsel %vm995, %v328, 6
    %v998 = vsel %vm507, %v996, 2147483647
    %v999 = vand.u32 %v998, 65535
    %v1000 = vshra.s32 %v998, 16
    %v1001 = vcvt.s32.f32 %v999
    %v1002 = vcvt.s32.f32 %v1000
    %1003 = vmin.xlane.f32.xlu0 %v1002
    %v1004 = vpop.xlane.xlu0 %1003
    %vm1005 = vcmp.eq.f32.partialorder %v1002, %v1004
    %v1006 = vsel %vm1005, %v1001, inf
    %1007 = vmin.xlane.f32.xlu0 %v1006
    %v1008 = vpop.xlane.xlu0 %1007
    %v1009 = vcvt.f32.s32 %v1008
    %v1010 = vcvt.f32.s32 %v1004
    %v1011 = vshll.u32 %v1010, 16
    %v1012 = vadd.s32 %v1011, %v1009
    %v1013 = vsel %vm507, %v997, 2147483647
    %v1014 = vand.u32 %v1013, 65535
    %v1015 = vshra.s32 %v1013, 16
    %v1016 = vcvt.s32.f32 %v1014
    %v1017 = vcvt.s32.f32 %v1015
    %1018 = vmin.xlane.f32.xlu0 %v1017
    %v1019 = vpop.xlane.xlu0 %1018
    %vm1020 = vcmp.eq.f32.partialorder %v1017, %v1019
    %v1021 = vsel %vm1020, %v1016, inf
    %1022 = vmin.xlane.f32.xlu0 %v1021
    %v1023 = vpop.xlane.xlu0 %1022
    %v1024 = vcvt.f32.s32 %v1023
    %v1025 = vcvt.f32.s32 %v1019
    %v1026 = vshll.u32 %v1025, 16
    %v1027 = vadd.s32 %v1026, %v1024
    %vm1028 = vcmp.gt.f32.partialorder %v923, %v990
    %vm1029 = vcmp.gt.f32.partialorder %v927, %v993
    %vm1030 = vcmp.eq.s32.totalorder %v328, %v1012
    %vm1031 = vcmp.eq.s32.totalorder %v328, %v1027
    %v1032 = vsel %vm1028, 1, 0
    %v1033 = vsel %vm1029, 1, 0
    %vm1034 = vcmp.eq.s32.totalorder %v1032, 1
    %vm1035 = vcmp.eq.s32.totalorder %v1033, 1
    %vm1036 = vmand %vm1034, %vm1030
    %vm1037 = vmand %vm1035, %vm1031
    %v1038 = vsel %vm1036, %v923, %v918
    %v1039 = vsel %vm1037, %v927, %v919
    %v1040 = vmax.f32 %v982, %v984
    %v1041 = vmax.f32 %v1040, %v983
    %1042 = vmax.xlane.f32.xlu0 %v1041
    %v1043 = vpop.xlane.xlu0 %1042
    %v1044 = vmax.f32 %v985, %v987
    %v1045 = vmax.f32 %v1044, %v986
    %1046 = vmax.xlane.f32.xlu0 %v1045
    %v1047 = vpop.xlane.xlu0 %1046
    %v1048 = vsel %vm507, %v1038, inf
    %1049 = vmin.xlane.f32.xlu0 %v1048
    %v1050 = vpop.xlane.xlu0 %1049
    %v1051 = vsel %vm507, %v1039, inf
    %1052 = vmin.xlane.f32.xlu0 %v1051
    %v1053 = vpop.xlane.xlu0 %1052
    %vm1054 = vcmp.eq.f32.partialorder %v1038, %v1050
    %vm1055 = vcmp.eq.f32.partialorder %v1039, %v1053
    %v1056 = vsel %vm1054, %v328, 6
    %v1057 = vsel %vm1055, %v328, 6
    %v1058 = vsel %vm507, %v1056, 2147483647
    %v1059 = vand.u32 %v1058, 65535
    %v1060 = vshra.s32 %v1058, 16
    %v1061 = vcvt.s32.f32 %v1059
    %v1062 = vcvt.s32.f32 %v1060
    %1063 = vmin.xlane.f32.xlu0 %v1062
    %v1064 = vpop.xlane.xlu0 %1063
    %vm1065 = vcmp.eq.f32.partialorder %v1062, %v1064
    %v1066 = vsel %vm1065, %v1061, inf
    %1067 = vmin.xlane.f32.xlu0 %v1066
    %v1068 = vpop.xlane.xlu0 %1067
    %v1069 = vcvt.f32.s32 %v1068
    %v1070 = vcvt.f32.s32 %v1064
    %v1071 = vshll.u32 %v1070, 16
    %v1072 = vadd.s32 %v1071, %v1069
    %v1073 = vsel %vm507, %v1057, 2147483647
    %v1074 = vand.u32 %v1073, 65535
    %v1075 = vshra.s32 %v1073, 16
    %v1076 = vcvt.s32.f32 %v1074
    %v1077 = vcvt.s32.f32 %v1075
    %1078 = vmin.xlane.f32.xlu0 %v1077
    %v1079 = vpop.xlane.xlu0 %1078
    %vm1080 = vcmp.eq.f32.partialorder %v1077, %v1079
    %v1081 = vsel %vm1080, %v1076, inf
    %1082 = vmin.xlane.f32.xlu0 %v1081
    %v1083 = vpop.xlane.xlu0 %1082
    %v1084 = vcvt.f32.s32 %v1083
    %v1085 = vcvt.f32.s32 %v1079
    %v1086 = vshll.u32 %v1085, 16
    %v1087 = vadd.s32 %v1086, %v1084
    %vm1088 = vcmp.gt.f32.partialorder %v1043, %v1050
    %vm1089 = vcmp.gt.f32.partialorder %v1047, %v1053
    %vm1090 = vcmp.eq.s32.totalorder %v328, %v1072
    %vm1091 = vcmp.eq.s32.totalorder %v328, %v1087
    %v1092 = vsel %vm1088, 1, 0
    %v1093 = vsel %vm1089, 1, 0
    %vm1094 = vcmp.eq.s32.totalorder %v1092, 1
    %vm1095 = vcmp.eq.s32.totalorder %v1093, 1
    %vm1096 = vmand %vm1094, %vm1090
    %vm1097 = vmand %vm1095, %vm1091
    %v1098 = vsel %vm1096, %v1043, %v1038
    %v1099 = vsel %vm1097, %v1047, %v1039
    %1100 = vst.msk [vmem:[#allocation5] sm:$0xff] %vm507, %v1098
    %1101 = vst.msk [vmem:[#allocation5 + $0x8] sm:$0xff] %vm507, %v1099
    // Predicated region
    $region22: #{tpu_custom_call.1} parent=1 // pred_check
      %p1102 = pneg %p29
    $region23: #{tpu_custom_call.1} parent=1 // pred_check_branch
      %1104 = sbr.rel (%p1102) target = $region25
    $region24: #{tpu_custom_call.1} parent=1 // pred_region
      %v1105 = vld [vmem:[#allocation2] sm:$0xff]
      %v1106 = vld [vmem:[#allocation2 + $0x8] sm:$0xff]
      %v1107 = vld [vmem:[#allocation3] sm:$0xff]
      %v1108 = vld [vmem:[#allocation3 + $0x8] sm:$0xff]
      %v1109 = vlog2.pop %v1107
      %v1110 = vmul.f32 %v1109, 0.6931472
      %v1111 = vlog2.pop %v1108
      %v1112 = vmul.f32 %v1111, 0.6931472
      %v1113 = vadd.f32 %v1105, %v1110
      %v1114 = vadd.f32 %v1106, %v1112
      %v1115 = vld [vmem:[#allocation4] sm:$0xff]
      %v1116 = vld [vmem:[#allocation4 + $0x8] sm:$0xff]
      %v1117 = vld [vmem:[#allocation5] sm:$0xff]
      %v1118 = vld [vmem:[#allocation5 + $0x8] sm:$0xff]
      %v1119 = vsel %vm507, %v1117, 0.0
      %1120 = vadd.xlane.f32.xlu0 %v1119
      %v1121 = vpop.xlane.xlu0 %1120
      %v1122 = vsel %vm507, %v1118, 0.0
      %1123 = vadd.xlane.f32.xlu0 %v1122
      %v1124 = vpop.xlane.xlu0 %1123
      %v1125 = vsel %vm507, %v1117, inf
      %1126 = vmin.xlane.f32.xlu0 %v1125
      %v1127 = vpop.xlane.xlu0 %1126
      %v1128 = vsel %vm507, %v1118, inf
      %1129 = vmin.xlane.f32.xlu0 %v1128
      %v1130 = vpop.xlane.xlu0 %1129
      %vm1131 = vcmp.ge.f32.partialorder %v1115, %v1127
      %vm1132 = vcmp.ge.f32.partialorder %v1116, %v1130
      %v1133 = vsel %vm1131, 1, 0
      %v1134 = vsel %vm1132, 1, 0
      %v1135 = vcvt.s32.f32 %v1133
      %v1136 = vcvt.s32.f32 %v1134
      %v1137 = vmul.f32 %v1135, %v1115
      %v1138 = vmul.f32 %v1136, %v1116
      %v1139 = vsub.f32 %v1121, %v1137
      %v1140 = vsub.f32 %v1124, %v1138
      %v1141 = vmul.f32 %v1139, 0.16666667
      %v1142 = vmul.f32 %v1140, 0.16666667
      %v1143 = vadd.f32 %v1141, %v1115
      %v1144 = vadd.f32 %v1142, %v1116
      %v1145 = vsub.f32 6.0, %v1135
      %v1146 = vsub.f32 6.0, %v1136
      %v1147 = vmul.f32 %v1145, 0.16666667
      %v1148 = vmul.f32 %v1146, 0.16666667
      %v1149 = vadd.f32 %v1147, 1.0
      %v1150 = vadd.f32 %v1148, 1.0
      %v1151 = vmul.f32 %v1149, %v1113
      %v1152 = vmul.f32 %v1150, %v1114
      %v1153 = vsub.f32 %v1143, %v1151
      %v1154 = vsub.f32 %v1144, %v1152
      %v1155 = vsub.f32 0.0, %v1153
      %v1156 = vsub.f32 0.0, %v1154
      %1157 = vst.msk [vmem:[%s3] sm:$0xff] %vm378, %v1155
      %1158 = vst.msk [vmem:[%s3 + $0x8] sm:$0xff] %vm378, %v1156
    $region25: #{tpu_custom_call.1} parent=1 // pred_fallthru
      _
    // Predicated region
    $region26: #{tpu_custom_call.1} parent=1 // pred_check
      _
    $region27: #{tpu_custom_call.1} parent=1 // pred_check_branch
      %1160 = sbr.rel (0) target = $region29
    $region28: #{tpu_custom_call.1} parent=1 // pred_region
      _
    $region29: #{tpu_custom_call.1} parent=1 // pred_fallthru
      _
    // Predicated region
    $region30: #{tpu_custom_call.1} parent=1 // pred_check
      _
    $region31: #{tpu_custom_call.1} parent=1 // pred_check_branch
      %1162 = sbr.rel (0) target = $region33
    $region32: #{tpu_custom_call.1} parent=1 // pred_region
      _
    $region33: #{tpu_custom_call.1} parent=1 // pred_fallthru
      _
    %1163 = vsyncpa [#allocation7], 1

</llo_original>
